<compile_context>
chip_gen: v6e
topology: v6e:2x2x1
jax: 0.10.0
libtpu: 0.0.40
codegen_flags: <defaults>
</compile_context>

<pallas_src>
import functools

import jax
import jax.numpy as jnp
from jax.experimental import pallas as pl
from jax.experimental.pallas import tpu as pltpu

INPUT_SIZE = 28 * 28        # 784
HIDDEN_SIZE = 256
LATENT_SIZE = 64
OUT_SIZE = 2 * LATENT_SIZE  # 128 -> exactly one lane-vreg wide (lane dense)


def vae_encoder_kernel(x_ref, w1_ref, b1_ref, w2_ref, b2_ref, out_ref):
    # x_ref: (TILE_B, 784) f32, w1: (784, 256) bf16, b1: (1, 256) f32
    # w2: (256, 128) bf16, b2: (1, 128) f32, out: (TILE_B, 128) f32
    # Cast x to bf16 in-kernel (VPU) so the HBM stream stays a single f32 read.
    x = x_ref[...].astype(jnp.bfloat16)

    # fc1 + relu (bf16 MXU inputs, f32 accumulation; bias/ReLU in f32 on VPU)
    h = jnp.dot(x, w1_ref[...], preferred_element_type=jnp.float32) + b1_ref[...]
    h = jnp.maximum(h, 0.0)

    # fc2: single fused lane-dense N=128 matmul producing [mu | log_var]
    h = h.astype(w2_ref.dtype)  # back to bf16 for the second MXU pass
    out = jnp.dot(h, w2_ref[...], preferred_element_type=jnp.float32) + b2_ref[...]

    out_ref[...] = out.astype(out_ref.dtype)


def _round_up(n, m):
    return (n + m - 1) // m * m


def _choose_tile_b(B, tile_b):
    """Sublane-aligned batch tile; prefer >=2 grid steps (v7x megacore)."""
    tb = min(tile_b, _round_up(B, 8))
    if B > 8 and pl.cdiv(B, tb) < 2:
        # Split a single-tile grid into two so the "parallel" batch axis can
        # shard across both v7x TensorCores.
        tb = max(8, _round_up(pl.cdiv(B, 2), 8))
    return tb


@functools.partial(jax.jit, static_argnames=("tile_b",))
def vae_encoder_forward(x, params, *, tile_b=512):
    """Returns (mu, log_var), each (B, 64) float32. x is (B, 784) float32."""
    B = x.shape[0]
    tb = _choose_tile_b(B, tile_b)
    # Ragged last block (when tb does not divide B) is edge-masked by the
    # pipeline -- no padded copy of x is materialized.
    grid = (pl.cdiv(B, tb),)

    w1, b1 = params["w1"], params["b1"]
    w2, b2 = params["w2"], params["b2"]

    flops = 2 * B * (INPUT_SIZE * HIDDEN_SIZE + HIDDEN_SIZE * OUT_SIZE)
    bytes_accessed = (
        B * INPUT_SIZE * 4                                          # x (f32)
        + (INPUT_SIZE * HIDDEN_SIZE + HIDDEN_SIZE * OUT_SIZE) * 2   # weights (bf16)
        + (HIDDEN_SIZE + OUT_SIZE) * 4                              # biases (f32)
        + B * OUT_SIZE * 4                                          # fused output (f32)
    )

    fused = pl.pallas_call(
        vae_encoder_kernel,
        out_shape=jax.ShapeDtypeStruct((B, OUT_SIZE), jnp.float32),
        grid=grid,
        in_specs=[
            # batch-tiled activations (software-pipelined across grid steps)
            pl.BlockSpec((tb, INPUT_SIZE), lambda b: (b, 0)),
            # weights / biases: constant block index -> fetched once, VMEM-resident
            pl.BlockSpec((INPUT_SIZE, HIDDEN_SIZE), lambda b: (0, 0)),
            pl.BlockSpec((1, HIDDEN_SIZE), lambda b: (0, 0)),
            pl.BlockSpec((HIDDEN_SIZE, OUT_SIZE), lambda b: (0, 0)),
            pl.BlockSpec((1, OUT_SIZE), lambda b: (0, 0)),
        ],
        out_specs=pl.BlockSpec((tb, OUT_SIZE), lambda b: (b, 0)),
        compiler_params=pltpu.CompilerParams(
            dimension_semantics=("parallel",),  # megacore-shard batch on v7x
        ),
        cost_estimate=pl.CostEstimate(
            flops=flops, transcendentals=0, bytes_accessed=bytes_accessed
        ),
    )(x, w1, b1, w2, b2)

    mu = fused[:, :LATENT_SIZE]
    log_var = fused[:, LATENT_SIZE:]
    return mu, log_var


def init_params(key):
    """PyTorch-like uniform fan-in init. Weights stored [in, out] in bf16."""
    def linear(key, fan_in, fan_out):
        kw, kb = jax.random.split(key)
        bound = 1.0 / jnp.sqrt(jnp.float32(fan_in))
        w = jax.random.uniform(kw, (fan_in, fan_out), jnp.float32, -bound, bound)
        b = jax.random.uniform(kb, (1, fan_out), jnp.float32, -bound, bound)
        return w.astype(jnp.bfloat16), b  # bf16 weights, f32 biases

    k1, k2 = jax.random.split(key)
    w1, b1 = linear(k1, INPUT_SIZE, HIDDEN_SIZE)
    # fc2 produces [mu | log_var] in one (256, 128) weight -- same column order
    # as the PyTorch layer, so splitting at 64 reproduces torch.split(x, 64, 1).
    w2, b2 = linear(k2, HIDDEN_SIZE, OUT_SIZE)
    return {"w1": w1, "b1": b1, "w2": w2, "b2": b2}


if __name__ == "__main__":
    key = jax.random.PRNGKey(0)
    k_param, k_x = jax.random.split(key)

    # B=200: exercises a 2-step grid (v7x megacore split) AND a ragged,
    # edge-masked last block (no wrapper-side padding).
    B = 200
    params = init_params(k_param)
    x = jax.random.uniform(k_x, (B, INPUT_SIZE), jnp.float32)  # flattened 28x28

    mu, log_var = jax.block_until_ready(vae_encoder_forward(x, params))

    # Pure-JAX reference on the same dtype path (bf16 matmuls, f32 accum).
    xb = x.astype(jnp.bfloat16)
    h = jnp.dot(xb, params["w1"], preferred_element_type=jnp.float32) + params["b1"]
    h = jnp.maximum(h, 0.0).astype(jnp.bfloat16)
    fused_ref = jnp.dot(h, params["w2"], preferred_element_type=jnp.float32) + params["b2"]
    mu_ref = fused_ref[:, :LATENT_SIZE]
    lv_ref = fused_ref[:, LATENT_SIZE:]

    assert mu.shape == (B, LATENT_SIZE) and log_var.shape == (B, LATENT_SIZE)
    assert mu.dtype == jnp.float32 and log_var.dtype == jnp.float32
    assert jnp.allclose(mu, mu_ref, atol=1e-2, rtol=1e-2)
    assert jnp.allclose(log_var, lv_ref, atol=1e-2, rtol=1e-2)

    print("KERNEL_OK")
</pallas_src>

<mosaic_0001>
module attributes {stable_mosaic.version = 11 : i64} {
  func.func @vae_encoder_kernel(%arg0: i32, %arg1: memref<104x784xf32, #tpu.memory_space<vmem>>, %arg2: memref<784x256xbf16, #tpu.memory_space<vmem>>, %arg3: memref<1x256xf32, #tpu.memory_space<vmem>>, %arg4: memref<256x128xbf16, #tpu.memory_space<vmem>>, %arg5: memref<1x128xf32, #tpu.memory_space<vmem>>, %arg6: memref<104x128xf32, #tpu.memory_space<vmem>>) attributes {dimension_semantics = [#tpu.dimension_semantics<parallel>], iteration_bounds = array<i64: 2>, scalar_prefetch = 0 : i64, scratch_operands = 0 : i64, tpu.core_type = #tpu.core_type<tc>, window_params = [{transform_indices = @transform_0, window_bounds = array<i64: 104, 784>}, {pipeline_mode = #tpu.pipeline_mode<synchronous>, transform_indices = @transform_1, window_bounds = array<i64: 784, 256>}, {pipeline_mode = #tpu.pipeline_mode<synchronous>, transform_indices = @transform_2, window_bounds = array<i64: 1, 256>}, {pipeline_mode = #tpu.pipeline_mode<synchronous>, transform_indices = @transform_3, window_bounds = array<i64: 256, 128>}, {pipeline_mode = #tpu.pipeline_mode<synchronous>, transform_indices = @transform_4, window_bounds = array<i64: 1, 128>}, {transform_indices = @transform_5, window_bounds = array<i64: 104, 128>}]} {
    %c0 = arith.constant 0 : index
    %c0_0 = arith.constant 0 : index
    %0 = vector.load %arg1[%c0, %c0_0] : memref<104x784xf32, #tpu.memory_space<vmem>>, vector<104x784xf32>
    %1 = arith.truncf %0 : vector<104x784xf32> to vector<104x784xbf16>
    %c0_1 = arith.constant 0 : index
    %c0_2 = arith.constant 0 : index
    %2 = vector.load %arg2[%c0_1, %c0_2] : memref<784x256xbf16, #tpu.memory_space<vmem>>, vector<784x256xbf16>
    %cst = arith.constant dense<0.000000e+00> : vector<104x256xf32>
    %3 = tpu.matmul %1, %2, %cst {dimension_numbers = #tpu.dot_dimension_numbers<[1], [0], [0], [1], [0, 0, 1, 1], [], []>} : vector<104x784xbf16>, vector<784x256xbf16>, vector<104x256xf32> -> vector<104x256xf32>
    %c0_3 = arith.constant 0 : index
    %c0_4 = arith.constant 0 : index
    %4 = vector.load %arg3[%c0_3, %c0_4] : memref<1x256xf32, #tpu.memory_space<vmem>>, vector<1x256xf32>
    %5 = vector.broadcast %4 : vector<1x256xf32> to vector<104x256xf32>
    %6 = arith.addf %3, %5 : vector<104x256xf32>
    %cst_5 = arith.constant 0.000000e+00 : f32
    %7 = vector.broadcast %cst_5 : f32 to vector<104x256xf32>
    %8 = arith.maximumf %6, %7 : vector<104x256xf32>
    %9 = arith.truncf %8 : vector<104x256xf32> to vector<104x256xbf16>
    %c0_6 = arith.constant 0 : index
    %c0_7 = arith.constant 0 : index
    %10 = vector.load %arg4[%c0_6, %c0_7] : memref<256x128xbf16, #tpu.memory_space<vmem>>, vector<256x128xbf16>
    %cst_8 = arith.constant dense<0.000000e+00> : vector<104x128xf32>
    %11 = tpu.matmul %9, %10, %cst_8 {dimension_numbers = #tpu.dot_dimension_numbers<[1], [0], [0], [1], [0, 0, 1, 1], [], []>} : vector<104x256xbf16>, vector<256x128xbf16>, vector<104x128xf32> -> vector<104x128xf32>
    %c0_9 = arith.constant 0 : index
    %c0_10 = arith.constant 0 : index
    %12 = vector.load %arg5[%c0_9, %c0_10] : memref<1x128xf32, #tpu.memory_space<vmem>>, vector<1x128xf32>
    %13 = vector.broadcast %12 : vector<1x128xf32> to vector<104x128xf32>
    %14 = arith.addf %11, %13 : vector<104x128xf32>
    %c0_11 = arith.constant 0 : index
    %c0_12 = arith.constant 0 : index
    %15 = vector.load %arg6[%c0_11, %c0_12] : memref<104x128xf32, #tpu.memory_space<vmem>>, vector<104x128xf32>
    tpu.vector_store %arg6[%c0_11, %c0_12], %14 {strides = array<i32>} : memref<104x128xf32, #tpu.memory_space<vmem>>, vector<104x128xf32>,
    return
  }
  func.func @transform_0(%arg0: i32) -> (i32, i32) {
    %c0_i32 = arith.constant 0 : i32
    %c0_i32_0 = arith.constant 0 : i32
    return %arg0, %c0_i32 : i32, i32
  }
  func.func @transform_1(%arg0: i32) -> (i32, i32) {
    %c0_i32 = arith.constant 0 : i32
    %c0_i32_0 = arith.constant 0 : i32
    %c0_i32_1 = arith.constant 0 : i32
    return %c0_i32, %c0_i32_0 : i32, i32
  }
  func.func @transform_2(%arg0: i32) -> (i32, i32) {
    %c0_i32 = arith.constant 0 : i32
    %c0_i32_0 = arith.constant 0 : i32
    %c0_i32_1 = arith.constant 0 : i32
    return %c0_i32, %c0_i32_0 : i32, i32
  }
  func.func @transform_3(%arg0: i32) -> (i32, i32) {
    %c0_i32 = arith.constant 0 : i32
    %c0_i32_0 = arith.constant 0 : i32
    %c0_i32_1 = arith.constant 0 : i32
    return %c0_i32, %c0_i32_0 : i32, i32
  }
  func.func @transform_4(%arg0: i32) -> (i32, i32) {
    %c0_i32 = arith.constant 0 : i32
    %c0_i32_0 = arith.constant 0 : i32
    %c0_i32_1 = arith.constant 0 : i32
    return %c0_i32, %c0_i32_0 : i32, i32
  }
  func.func @transform_5(%arg0: i32) -> (i32, i32) {
    %c0_i32 = arith.constant 0 : i32
    %c0_i32_0 = arith.constant 0 : i32
    return %arg0, %c0_i32 : i32, i32
  }
}

</mosaic_0001>

<llo_original>
// kernel: vae_encoder_forward.1
$region0: #{vae_encoder_forward.1}
  #allocation0 [shape = 'u32[]', space=smem, size = 0x4, offset = 0x4, fixed_abs, tag = 'smem constant byte address 0x4 - core index']
  #allocation1 [shape = 'u32[144,128]{1,0:T(1,128)}', space=vmem, size = 0x12000, scoped, tag = 'internal scratch']
  %s0 = inlined_call_operand.hbm [shape: f32[200,784], index: 0, kind: input, shape index: {}]
  %s1 = inlined_call_operand.hbm [shape: bf16[784,256], index: 1, kind: input, shape index: {}]
  %s2 = inlined_call_operand.hbm [shape: f32[1,256], index: 2, kind: input, shape index: {}]
  %s3 = inlined_call_operand.hbm [shape: bf16[256,128], index: 3, kind: input, shape index: {}]
  %s4 = inlined_call_operand.vmem [shape: f32[1,128], index: 4, kind: input, shape index: {}]
  %s5 = inlined_call_operand.vmem [shape: f32[200,128], index: 5, kind: output, shape index: {}]
  %s6 = sld [smem:[#allocation0]]
  $region117: #{vae_encoder_forward.1} parent=0
    _
  %s8 = ssub.s32 1, %s6
  %s9 = scalar_select 0, %s8, %s6
  $region1: #{vae_encoder_forward.1} parent=0
    #allocation2 [shape = 'u8[745472]{0}', space=vmem, size = 0xb6000, scoped, tag = 'input window, operand 0']
    #allocation3 [shape = 's32[2]{0}', space=sflag, size = 0x8, scoped, tag = 'scoped memory for vae_encoder_forward.1']
    #allocation4 [shape = 'u8[401408]{0}', space=vmem, size = 0x62000, scoped, tag = 'input window, operand 1, single buffered']
    #allocation5 [shape = 's32[1]{0}', space=sflag, size = 0x4, scoped, tag = 'scoped memory for vae_encoder_forward.1']
    #allocation6 [shape = 'u8[1024]{0}', space=vmem, size = 0x400, scoped, tag = 'input window, operand 2, single buffered']
    #allocation7 [shape = 'u8[65536]{0}', space=vmem, size = 0x10000, scoped, tag = 'input window, operand 3, single buffered']
    #allocation8 [shape = 's32[1]{0}', space=sflag, size = 0x4, scoped, tag = 'scoped memory for vae_encoder_forward.1']
    #allocation9 [shape = 'u8[106496]{0}', space=vmem, size = 0x1a000, scoped, tag = 'output window, operand 0']
    %10 = vsyncpa [#allocation3], 0
    %s11 = scalar_lea.sflag [#allocation3], 1
    %12 = vsyncpa %s11, 0
    %13 = vsyncpa [#allocation5], 0
    %14 = vsyncpa [#allocation8], 0
    loop: start=0, step=1, limit=4
    $region2: #{vae_encoder_forward.1} parent=1 // loop_pre_header
      _
    $region3: #{vae_encoder_forward.1} parent=1 // loop_header
      %s16 = sphi 0, %s20
      %p17 = scmp.ge.s32.totalorder %s16, 4
      %s26 = sphi 0, %s28
      %s29 = sphi 0, %s26
      %s30 = sphi 0, %s29
      %s46 = sphi 0, %s30
      %s50 = sphi 0, %s50
      %s52 = sphi 0, %s50
      %s53 = sphi 0, %s52
      %s67 = sphi 0, %s53
      %s71 = sphi 0, %s71
      %s73 = sphi 0, %s71
      %s74 = sphi 0, %s73
      %s88 = sphi 0, %s74
      %s92 = sphi 0, %s92
      %s94 = sphi 0, %s92
      %s95 = sphi 0, %s94
      %s109 = sphi 0, %s95
      %s113 = sphi 0, %s113
      %s115 = sphi 0, %s113
      %s116 = sphi 0, %s115
      %s130 = sphi 0, %s116
      %s136 = sphi 0, %s138
      %s139 = sphi 0, %s136
      %s140 = sphi 0, %s139
      %s156 = sphi 0, %s140
    $region4: #{vae_encoder_forward.1} parent=1 // loop_header_branch
      %19 = sbr.rel (%p17) target = $region8
    $region5: #{vae_encoder_forward.1} parent=1 // loop_body
      %s21 = ssub.s32 %s16, 1
      %s22 = ssub.s32 %s16, 2
      %s23 = sadd.s32 %s16, 1
      %s24 = ssub.s32 %s16, %s23
      %p25 = scmp.eq.s32.totalorder %s24, 0
      %s27 = sadd.s32 %s26, 1
      %s28 = scalar_select %p25, %s26, %s27
      %p31 = pneg %p25
      %p32 = scmp.eq.s32.totalorder %s16, 1
      %p33 = por %p31, %p32
      %p34 = scmp.ne.s32.totalorder %s26, %s29
      %p35 = scmp.eq.s32.totalorder %s16, 0
      %p36 = por %p34, %p35
      %p37 = scmp.ne.s32.totalorder %s26, %s29
      %p38 = scmp.eq.s32.totalorder %s21, 1
      %p39 = por %p37, %p38
      %p40 = scmp.ne.s32.totalorder %s29, %s30
      %p41 = scmp.eq.s32.totalorder %s21, 0
      %p42 = por %p40, %p41
      %p43 = scmp.ne.s32.totalorder %s29, %s30
      %p44 = scmp.eq.s32.totalorder %s22, 1
      %p45 = por %p43, %p44
      %p47 = scmp.ne.s32.totalorder %s30, %s46
      %p48 = scmp.eq.s32.totalorder %s22, 0
      %p49 = por %p47, %p48
      %s51 = sadd.s32 %s50, 1
      %p54 = scmp.eq.s32.totalorder %s16, 1
      %p55 = scmp.ne.s32.totalorder %s50, %s52
      %p56 = scmp.eq.s32.totalorder %s16, 0
      %p57 = por %p55, %p56
      %p58 = scmp.ne.s32.totalorder %s50, %s52
      %p59 = scmp.eq.s32.totalorder %s21, 1
      %p60 = por %p58, %p59
      %p61 = scmp.ne.s32.totalorder %s52, %s53
      %p62 = scmp.eq.s32.totalorder %s21, 0
      %p63 = por %p61, %p62
      %p64 = scmp.ne.s32.totalorder %s52, %s53
      %p65 = scmp.eq.s32.totalorder %s22, 1
      %p66 = por %p64, %p65
      %p68 = scmp.ne.s32.totalorder %s53, %s67
      %p69 = scmp.eq.s32.totalorder %s22, 0
      %p70 = por %p68, %p69
      %s72 = sadd.s32 %s71, 1
      %p75 = scmp.eq.s32.totalorder %s16, 1
      %p76 = scmp.ne.s32.totalorder %s71, %s73
      %p77 = scmp.eq.s32.totalorder %s16, 0
      %p78 = por %p76, %p77
      %p79 = scmp.ne.s32.totalorder %s71, %s73
      %p80 = scmp.eq.s32.totalorder %s21, 1
      %p81 = por %p79, %p80
      %p82 = scmp.ne.s32.totalorder %s73, %s74
      %p83 = scmp.eq.s32.totalorder %s21, 0
      %p84 = por %p82, %p83
      %p85 = scmp.ne.s32.totalorder %s73, %s74
      %p86 = scmp.eq.s32.totalorder %s22, 1
      %p87 = por %p85, %p86
      %p89 = scmp.ne.s32.totalorder %s74, %s88
      %p90 = scmp.eq.s32.totalorder %s22, 0
      %p91 = por %p89, %p90
      %s93 = sadd.s32 %s92, 1
      %p96 = scmp.eq.s32.totalorder %s16, 1
      %p97 = scmp.ne.s32.totalorder %s92, %s94
      %p98 = scmp.eq.s32.totalorder %s16, 0
      %p99 = por %p97, %p98
      %p100 = scmp.ne.s32.totalorder %s92, %s94
      %p101 = scmp.eq.s32.totalorder %s21, 1
      %p102 = por %p100, %p101
      %p103 = scmp.ne.s32.totalorder %s94, %s95
      %p104 = scmp.eq.s32.totalorder %s21, 0
      %p105 = por %p103, %p104
      %p106 = scmp.ne.s32.totalorder %s94, %s95
      %p107 = scmp.eq.s32.totalorder %s22, 1
      %p108 = por %p106, %p107
      %p110 = scmp.ne.s32.totalorder %s95, %s109
      %p111 = scmp.eq.s32.totalorder %s22, 0
      %p112 = por %p110, %p111
      %s114 = sadd.s32 %s113, 1
      %p117 = scmp.eq.s32.totalorder %s16, 1
      %p118 = scmp.ne.s32.totalorder %s113, %s115
      %p119 = scmp.eq.s32.totalorder %s16, 0
      %p120 = por %p118, %p119
      %p121 = scmp.ne.s32.totalorder %s113, %s115
      %p122 = scmp.eq.s32.totalorder %s21, 1
      %p123 = por %p121, %p122
      %p124 = scmp.ne.s32.totalorder %s115, %s116
      %p125 = scmp.eq.s32.totalorder %s21, 0
      %p126 = por %p124, %p125
      %p127 = scmp.ne.s32.totalorder %s115, %s116
      %p128 = scmp.eq.s32.totalorder %s22, 1
      %p129 = por %p127, %p128
      %p131 = scmp.ne.s32.totalorder %s116, %s130
      %p132 = scmp.eq.s32.totalorder %s22, 0
      %p133 = por %p131, %p132
      %s134 = ssub.s32 %s16, %s23
      %p135 = scmp.eq.s32.totalorder %s134, 0
      %s137 = sadd.s32 %s136, 1
      %s138 = scalar_select %p135, %s136, %s137
      %p141 = pneg %p135
      %p142 = scmp.eq.s32.totalorder %s16, 1
      %p143 = por %p141, %p142
      %p144 = scmp.ne.s32.totalorder %s136, %s139
      %p145 = scmp.eq.s32.totalorder %s16, 0
      %p146 = por %p144, %p145
      %p147 = scmp.ne.s32.totalorder %s136, %s139
      %p148 = scmp.eq.s32.totalorder %s21, 1
      %p149 = por %p147, %p148
      %p150 = scmp.ne.s32.totalorder %s139, %s140
      %p151 = scmp.eq.s32.totalorder %s21, 0
      %p152 = por %p150, %p151
      %p153 = scmp.ne.s32.totalorder %s139, %s140
      %p154 = scmp.eq.s32.totalorder %s22, 1
      %p155 = por %p153, %p154
      %p157 = scmp.ne.s32.totalorder %s140, %s156
      %p158 = scmp.eq.s32.totalorder %s22, 0
      %p159 = por %p157, %p158
      %p160 = scmp.le.s32.totalorder 1, %s16
      %p161 = scmp.lt.s32.totalorder %s16, 3
      %p162 = pnand %p160, %p161
      %p163 = pneg %p162
      // Predicated region
      $region9: #{vae_encoder_forward.1} parent=5 // pred_check
        _
      $region10: #{vae_encoder_forward.1} parent=5 // pred_check_branch
        %165 = sbr.rel (%p162) target = $region12
      $region11: #{vae_encoder_forward.1} parent=5 // pred_region
        %s166 = ssub.s32 %s16, 1
        // Predicated region
        $region13: #{vae_encoder_forward.1} parent=11 // pred_check
          %p167 = pneg %p63
        $region14: #{vae_encoder_forward.1} parent=11 // pred_check_branch
          %169 = sbr.rel (%p167) target = $region16
        $region15: #{vae_encoder_forward.1} parent=11 // pred_region
          %s171 = ssub.s32 12544, 12544
          %172 = vsyncadd [#allocation5], %s171
          %s173 = sshll.u32 [#allocation4], 4
          %s174 = int_to_ptr.vmem [resolvable:$true] %s173
          %179 = dma.hbm_to_vmem [thread:$0]  %s1, 12544, %s174, [#allocation5], 128, 128, 8
        $region16: #{vae_encoder_forward.1} parent=11 // pred_fallthru
          _
        // Predicated region
        $region17: #{vae_encoder_forward.1} parent=11 // pred_check
          %p180 = pneg %p84
        $region18: #{vae_encoder_forward.1} parent=11 // pred_check_branch
          %182 = sbr.rel (%p180) target = $region20
        $region19: #{vae_encoder_forward.1} parent=11 // pred_region
          %s184 = ssub.s32 32, 32
          %185 = vsyncadd [#allocation5], %s184
          %s187 = sshll.u32 [#allocation6], 4
          %s188 = int_to_ptr.vmem [resolvable:$true] %s187
          %190 = dma.hbm_to_vmem [thread:$0]  %s2, 32, %s188, [#allocation5]
        $region20: #{vae_encoder_forward.1} parent=11 // pred_fallthru
          _
        // Predicated region
        $region21: #{vae_encoder_forward.1} parent=11 // pred_check
          %p191 = pneg %p105
        $region22: #{vae_encoder_forward.1} parent=11 // pred_check_branch
          %193 = sbr.rel (%p191) target = $region24
        $region23: #{vae_encoder_forward.1} parent=11 // pred_region
          %s195 = ssub.s32 2048, 2048
          %196 = vsyncadd [#allocation8], %s195
          %s197 = sshll.u32 [#allocation7], 4
          %s198 = int_to_ptr.vmem [resolvable:$true] %s197
          %203 = dma.hbm_to_vmem [thread:$0]  %s3, 2048, %s198, [#allocation8], 64, 64, 4
        $region24: #{vae_encoder_forward.1} parent=11 // pred_fallthru
          _
        // Predicated region
        $region25: #{vae_encoder_forward.1} parent=11 // pred_check
          %p204 = pneg %p126
        $region26: #{vae_encoder_forward.1} parent=11 // pred_check_branch
          %206 = sbr.rel (%p204) target = $region28
        $region27: #{vae_encoder_forward.1} parent=11 // pred_region
          _
        $region28: #{vae_encoder_forward.1} parent=11 // pred_fallthru
          _
      $region12: #{vae_encoder_forward.1} parent=5 // pred_fallthru
        _
      %p207 = scmp.lt.s32.totalorder %s16, 2
      // Predicated region
      $region29: #{vae_encoder_forward.1} parent=5 // pred_check
        %p208 = pneg %p207
      $region30: #{vae_encoder_forward.1} parent=5 // pred_check_branch
        %210 = sbr.rel (%p208) target = $region32
      $region31: #{vae_encoder_forward.1} parent=5 // pred_region
        // Predicated region
        $region33: #{vae_encoder_forward.1} parent=31 // pred_check
          %p211 = pneg %p36
        $region34: #{vae_encoder_forward.1} parent=31 // pred_check_branch
          %213 = sbr.rel (%p211) target = $region36
        $region35: #{vae_encoder_forward.1} parent=31 // pred_region
          %s214 = sand.u32 %s26, 1
          %s215 = scalar_lea.sflag [#allocation3], %s214
          %s216 = sand.u32 %s26, 1
          %s217 = smul.addr %s216, 728
          %s218 = scalar_lea.vmem [#allocation2], %s217
          %s219 = smul.u32 13, %s16
          %s220 = ssub.s32 25, %s219
          %p221 = scmp.lt.s32.totalorder %s220, 13
          %s222 = scalar_select %p221, %s220, 13
          %s223 = smul.u32 128, %s222
          %s224 = smul.u32 %s223, 7
          %s226 = ssub.s32 11648, %s224
          %227 = vsyncadd %s215, %s226
          %p228 = scmp.ne.s32.totalorder 0, %s224
          %s229 = smul.addr %s219, 7
          %s230 = smul.addr %s229, 128
          %s231 = scalar_lea.hbm %s0, %s230
          %s232 = smul.u32 56, %s222
          %s233 = sshll.u32 %s218, 4
          %s234 = int_to_ptr.vmem [resolvable:$true] %s233
          %s235 = sshll.u32 %s232, 4
          %239 = dma.hbm_to_vmem [thread:$0]  (%p228), %s231, %s235, %s234, %s215, 896, 896, 56
        $region36: #{vae_encoder_forward.1} parent=31 // pred_fallthru
          _
      $region32: #{vae_encoder_forward.1} parent=5 // pred_fallthru
        _
      %p240 = scmp.le.s32.totalorder 1, %s16
      %p241 = scmp.lt.s32.totalorder %s16, 3
      %p242 = pnand %p240, %p241
      %p243 = pneg %p242
      // Predicated region
      $region37: #{vae_encoder_forward.1} parent=5 // pred_check
        _
      $region38: #{vae_encoder_forward.1} parent=5 // pred_check_branch
        %245 = sbr.rel (%p242) target = $region40
      $region39: #{vae_encoder_forward.1} parent=5 // pred_region
        %s246 = ssub.s32 %s16, 1
        %s247 = sand.u32 %s29, 1
        %s248 = scalar_lea.sflag [#allocation3], %s247
        %s249 = sand.u32 %s29, 1
        %s250 = smul.addr %s249, 728
        %s251 = scalar_lea.vmem [#allocation2], %s250
        // Predicated region
        $region41: #{vae_encoder_forward.1} parent=39 // pred_check
          %p252 = pneg %p42
        $region42: #{vae_encoder_forward.1} parent=39 // pred_check_branch
          %254 = sbr.rel (%p252) target = $region44
        $region43: #{vae_encoder_forward.1} parent=39 // pred_region
          %255 = dma.done %s248, 11648
        $region44: #{vae_encoder_forward.1} parent=39 // pred_fallthru
          _
        // Predicated region
        $region45: #{vae_encoder_forward.1} parent=39 // pred_check
          %p256 = pneg %p63
        $region46: #{vae_encoder_forward.1} parent=39 // pred_check_branch
          %258 = sbr.rel (%p256) target = $region48
        $region47: #{vae_encoder_forward.1} parent=39 // pred_region
          %259 = dma.done [#allocation5], 12544
        $region48: #{vae_encoder_forward.1} parent=39 // pred_fallthru
          _
        // Predicated region
        $region49: #{vae_encoder_forward.1} parent=39 // pred_check
          %p260 = pneg %p84
        $region50: #{vae_encoder_forward.1} parent=39 // pred_check_branch
          %262 = sbr.rel (%p260) target = $region52
        $region51: #{vae_encoder_forward.1} parent=39 // pred_region
          %263 = dma.done [#allocation5], 32
        $region52: #{vae_encoder_forward.1} parent=39 // pred_fallthru
          _
        // Predicated region
        $region53: #{vae_encoder_forward.1} parent=39 // pred_check
          %p264 = pneg %p105
        $region54: #{vae_encoder_forward.1} parent=39 // pred_check_branch
          %266 = sbr.rel (%p264) target = $region56
        $region55: #{vae_encoder_forward.1} parent=39 // pred_region
          %267 = dma.done [#allocation8], 2048
        $region56: #{vae_encoder_forward.1} parent=39 // pred_fallthru
          _
        %s268 = sand.u32 %s29, 1
        %s269 = scalar_lea.sflag [#allocation3], %s268
        %s270 = sand.u32 %s29, 1
        %s271 = smul.addr %s270, 728
        %s272 = scalar_lea.vmem [#allocation2], %s271
        %p273 = pneg %p42
        %p274 = pneg %p39
        %p275 = pneg %p63
        %p276 = pneg %p60
        %p277 = pneg %p84
        %p278 = pneg %p81
        %p279 = pneg %p105
        %p280 = pneg %p102
        %p281 = pneg %p126
        %p282 = pneg %p123
        %p283 = pneg %p152
        %p284 = pneg %p149
        %s285 = sand.u32 %s139, 1
        %s286 = sand.u32 %s139, 1
        %s287 = smul.addr %s286, 104
        %s288 = scalar_lea.vmem [#allocation9], %s287
        %s289 = smul.u32 13, %s21
        %s290 = ssub.s32 25, %s289
        %p291 = scmp.lt.s32.totalorder %s290, 13
        %s292 = scalar_select %p291, %s290, 13
        %s293 = smul.u32 128, %s292
        %s294 = smul.u32 %s293, 7
        %s295 = smul.u32 13, %s21
        %s296 = ssub.s32 25, %s295
        %p297 = scmp.lt.s32.totalorder %s296, 13
        %s298 = scalar_select %p297, %s296, 13
        %s299 = smul.u32 128, %s298
        %v301 = vld [vmem:[%s251] sm:$0xff]
        %v302 = vld [vmem:[%s251 + $0x8] sm:$0xff]
        %v303 = vld [vmem:[%s251 + $0x10] sm:$0xff]
        %v304 = vld [vmem:[%s251 + $0x18] sm:$0xff]
        %v305 = vld [vmem:[%s251 + $0x20] sm:$0xff]
        %v306 = vld [vmem:[%s251 + $0x28] sm:$0xff]
        %v307 = vld [vmem:[%s251 + $0x30] sm:$0xff]
        %v308 = vld [vmem:[%s251 + $0x38] sm:$0xff]
        %v309 = vld [vmem:[%s251 + $0x40] sm:$0xff]
        %v310 = vld [vmem:[%s251 + $0x48] sm:$0xff]
        %v311 = vld [vmem:[%s251 + $0x50] sm:$0xff]
        %v312 = vld [vmem:[%s251 + $0x58] sm:$0xff]
        %v313 = vld [vmem:[%s251 + $0x60] sm:$0xff]
        %v314 = vld [vmem:[%s251 + $0x68] sm:$0xff]
        %v315 = vld [vmem:[%s251 + $0x70] sm:$0xff]
        %v316 = vld [vmem:[%s251 + $0x78] sm:$0xff]
        %v317 = vld [vmem:[%s251 + $0x80] sm:$0xff]
        %v318 = vld [vmem:[%s251 + $0x88] sm:$0xff]
        %v319 = vld [vmem:[%s251 + $0x90] sm:$0xff]
        %v320 = vld [vmem:[%s251 + $0x98] sm:$0xff]
        %v321 = vld [vmem:[%s251 + $0xa0] sm:$0xff]
        %v322 = vld [vmem:[%s251 + $0xa8] sm:$0xff]
        %v323 = vld [vmem:[%s251 + $0xb0] sm:$0xff]
        %v324 = vld [vmem:[%s251 + $0xb8] sm:$0xff]
        %v325 = vld [vmem:[%s251 + $0xc0] sm:$0xff]
        %v326 = vld [vmem:[%s251 + $0xc8] sm:$0xff]
        %v327 = vld [vmem:[%s251 + $0xd0] sm:$0xff]
        %v328 = vld [vmem:[%s251 + $0xd8] sm:$0xff]
        %v329 = vld [vmem:[%s251 + $0xe0] sm:$0xff]
        %v330 = vld [vmem:[%s251 + $0xe8] sm:$0xff]
        %v331 = vld [vmem:[%s251 + $0xf0] sm:$0xff]
        %v332 = vld [vmem:[%s251 + $0xf8] sm:$0xff]
        %v333 = vld [vmem:[%s251 + $0x100] sm:$0xff]
        %v334 = vld [vmem:[%s251 + $0x108] sm:$0xff]
        %v335 = vld [vmem:[%s251 + $0x110] sm:$0xff]
        %v336 = vld [vmem:[%s251 + $0x118] sm:$0xff]
        %v337 = vld [vmem:[%s251 + $0x120] sm:$0xff]
        %v338 = vld [vmem:[%s251 + $0x128] sm:$0xff]
        %v339 = vld [vmem:[%s251 + $0x130] sm:$0xff]
        %v340 = vld [vmem:[%s251 + $0x138] sm:$0xff]
        %v341 = vld [vmem:[%s251 + $0x140] sm:$0xff]
        %v342 = vld [vmem:[%s251 + $0x148] sm:$0xff]
        %v343 = vld [vmem:[%s251 + $0x150] sm:$0xff]
        %v344 = vld [vmem:[%s251 + $0x158] sm:$0xff]
        %v345 = vld [vmem:[%s251 + $0x160] sm:$0xff]
        %v346 = vld [vmem:[%s251 + $0x168] sm:$0xff]
        %v347 = vld [vmem:[%s251 + $0x170] sm:$0xff]
        %v348 = vld [vmem:[%s251 + $0x178] sm:$0xff]
        %v349 = vld [vmem:[%s251 + $0x180] sm:$0xff]
        %v350 = vld [vmem:[%s251 + $0x188] sm:$0xff]
        %v351 = vld [vmem:[%s251 + $0x190] sm:$0xff]
        %v352 = vld [vmem:[%s251 + $0x198] sm:$0xff]
        %v353 = vld [vmem:[%s251 + $0x1a0] sm:$0xff]
        %v354 = vld [vmem:[%s251 + $0x1a8] sm:$0xff]
        %v355 = vld [vmem:[%s251 + $0x1b0] sm:$0xff]
        %v356 = vld [vmem:[%s251 + $0x1b8] sm:$0xff]
        %v357 = vld [vmem:[%s251 + $0x1c0] sm:$0xff]
        %v358 = vld [vmem:[%s251 + $0x1c8] sm:$0xff]
        %v359 = vld [vmem:[%s251 + $0x1d0] sm:$0xff]
        %v360 = vld [vmem:[%s251 + $0x1d8] sm:$0xff]
        %v361 = vld [vmem:[%s251 + $0x1e0] sm:$0xff]
        %v362 = vld [vmem:[%s251 + $0x1e8] sm:$0xff]
        %v363 = vld [vmem:[%s251 + $0x1f0] sm:$0xff]
        %v364 = vld [vmem:[%s251 + $0x1f8] sm:$0xff]
        %v365 = vld [vmem:[%s251 + $0x200] sm:$0xff]
        %v366 = vld [vmem:[%s251 + $0x208] sm:$0xff]
        %v367 = vld [vmem:[%s251 + $0x210] sm:$0xff]
        %v368 = vld [vmem:[%s251 + $0x218] sm:$0xff]
        %v369 = vld [vmem:[%s251 + $0x220] sm:$0xff]
        %v370 = vld [vmem:[%s251 + $0x228] sm:$0xff]
        %v371 = vld [vmem:[%s251 + $0x230] sm:$0xff]
        %v372 = vld [vmem:[%s251 + $0x238] sm:$0xff]
        %v373 = vld [vmem:[%s251 + $0x240] sm:$0xff]
        %v374 = vld [vmem:[%s251 + $0x248] sm:$0xff]
        %v375 = vld [vmem:[%s251 + $0x250] sm:$0xff]
        %v376 = vld [vmem:[%s251 + $0x258] sm:$0xff]
        %v377 = vld [vmem:[%s251 + $0x260] sm:$0xff]
        %v378 = vld [vmem:[%s251 + $0x268] sm:$0xff]
        %v379 = vld [vmem:[%s251 + $0x270] sm:$0xff]
        %v380 = vld [vmem:[%s251 + $0x278] sm:$0xff]
        %v381 = vld [vmem:[%s251 + $0x280] sm:$0xff]
        %v382 = vld [vmem:[%s251 + $0x288] sm:$0xff]
        %v383 = vld [vmem:[%s251 + $0x290] sm:$0xff]
        %v384 = vld [vmem:[%s251 + $0x298] sm:$0xff]
        %v385 = vld [vmem:[%s251 + $0x2a0] sm:$0xff]
        %v386 = vld [vmem:[%s251 + $0x2a8] sm:$0xff]
        %v387 = vld [vmem:[%s251 + $0x2b0] sm:$0xff]
        %v388 = vld [vmem:[%s251 + $0x2b8] sm:$0xff]
        %v389 = vld [vmem:[%s251 + $0x2c0] sm:$0xff]
        %v390 = vld [vmem:[%s251 + $0x2c8] sm:$0xff]
        %v391 = vld [vmem:[%s251 + $0x2d0] sm:$0xff]
        %v392 = vpack.c.bf16 %v308, %v301
        %v393 = vpack.c.bf16 %v309, %v302
        %v394 = vpack.c.bf16 %v310, %v303
        %v395 = vpack.c.bf16 %v311, %v304
        %v396 = vpack.c.bf16 %v312, %v305
        %v397 = vpack.c.bf16 %v313, %v306
        %v398 = vpack.c.bf16 %v314, %v307
        %v399 = vpack.c.bf16 %v322, %v315
        %v400 = vpack.c.bf16 %v323, %v316
        %v401 = vpack.c.bf16 %v324, %v317
        %v402 = vpack.c.bf16 %v325, %v318
        %v403 = vpack.c.bf16 %v326, %v319
        %v404 = vpack.c.bf16 %v327, %v320
        %v405 = vpack.c.bf16 %v328, %v321
        %v406 = vpack.c.bf16 %v336, %v329
        %v407 = vpack.c.bf16 %v337, %v330
        %v408 = vpack.c.bf16 %v338, %v331
        %v409 = vpack.c.bf16 %v339, %v332
        %v410 = vpack.c.bf16 %v340, %v333
        %v411 = vpack.c.bf16 %v341, %v334
        %v412 = vpack.c.bf16 %v342, %v335
        %v413 = vpack.c.bf16 %v350, %v343
        %v414 = vpack.c.bf16 %v351, %v344
        %v415 = vpack.c.bf16 %v352, %v345
        %v416 = vpack.c.bf16 %v353, %v346
        %v417 = vpack.c.bf16 %v354, %v347
        %v418 = vpack.c.bf16 %v355, %v348
        %v419 = vpack.c.bf16 %v356, %v349
        %v420 = vpack.c.bf16 %v364, %v357
        %v421 = vpack.c.bf16 %v365, %v358
        %v422 = vpack.c.bf16 %v366, %v359
        %v423 = vpack.c.bf16 %v367, %v360
        %v424 = vpack.c.bf16 %v368, %v361
        %v425 = vpack.c.bf16 %v369, %v362
        %v426 = vpack.c.bf16 %v370, %v363
        %v427 = vpack.c.bf16 %v378, %v371
        %v428 = vpack.c.bf16 %v379, %v372
        %v429 = vpack.c.bf16 %v380, %v373
        %v430 = vpack.c.bf16 %v381, %v374
        %v431 = vpack.c.bf16 %v382, %v375
        %v432 = vpack.c.bf16 %v383, %v376
        %v433 = vpack.c.bf16 %v384, %v377
        %v434 = vpack.c.bf16 %v385, %v385
        %v435 = vpack.c.bf16 %v386, %v386
        %v436 = vpack.c.bf16 %v387, %v387
        %v437 = vpack.c.bf16 %v388, %v388
        %v438 = vpack.c.bf16 %v389, %v389
        %v439 = vpack.c.bf16 %v390, %v390
        %v440 = vpack.c.bf16 %v391, %v391
        %v441 = vld [vmem:[#allocation4] sm:$0xff]
        %v442 = vld [vmem:[#allocation4 + $0x8] sm:$0xff]
        %v443 = vld [vmem:[#allocation4 + $0x10] sm:$0xff]
        %v444 = vld [vmem:[#allocation4 + $0x18] sm:$0xff]
        %v445 = vld [vmem:[#allocation4 + $0x20] sm:$0xff]
        %v446 = vld [vmem:[#allocation4 + $0x28] sm:$0xff]
        %v447 = vld [vmem:[#allocation4 + $0x30] sm:$0xff]
        %v448 = vld [vmem:[#allocation4 + $0x38] sm:$0xff]
        %v449 = vld [vmem:[#allocation4 + $0x40] sm:$0xff]
        %v450 = vld [vmem:[#allocation4 + $0x48] sm:$0xff]
        %v451 = vld [vmem:[#allocation4 + $0x50] sm:$0xff]
        %v452 = vld [vmem:[#allocation4 + $0x58] sm:$0xff]
        %v453 = vld [vmem:[#allocation4 + $0x60] sm:$0xff]
        %v454 = vld [vmem:[#allocation4 + $0x68] sm:$0xff]
        %v455 = vld [vmem:[#allocation4 + $0x70] sm:$0xff]
        %v456 = vld [vmem:[#allocation4 + $0x78] sm:$0xff]
        %v457 = vld [vmem:[#allocation4 + $0x80] sm:$0xff]
        %v458 = vld [vmem:[#allocation4 + $0x88] sm:$0xff]
        %v459 = vld [vmem:[#allocation4 + $0x90] sm:$0xff]
        %v460 = vld [vmem:[#allocation4 + $0x98] sm:$0xff]
        %v461 = vld [vmem:[#allocation4 + $0xa0] sm:$0xff]
        %v462 = vld [vmem:[#allocation4 + $0xa8] sm:$0xff]
        %v463 = vld [vmem:[#allocation4 + $0xb0] sm:$0xff]
        %v464 = vld [vmem:[#allocation4 + $0xb8] sm:$0xff]
        %v465 = vld [vmem:[#allocation4 + $0xc0] sm:$0xff]
        %v466 = vld [vmem:[#allocation4 + $0xc8] sm:$0xff]
        %v467 = vld [vmem:[#allocation4 + $0xd0] sm:$0xff]
        %v468 = vld [vmem:[#allocation4 + $0xd8] sm:$0xff]
        %v469 = vld [vmem:[#allocation4 + $0xe0] sm:$0xff]
        %v470 = vld [vmem:[#allocation4 + $0xe8] sm:$0xff]
        %v471 = vld [vmem:[#allocation4 + $0xf0] sm:$0xff]
        %v472 = vld [vmem:[#allocation4 + $0xf8] sm:$0xff]
        %v473 = vld [vmem:[#allocation4 + $0x100] sm:$0xff]
        %v474 = vld [vmem:[#allocation4 + $0x108] sm:$0xff]
        %v475 = vld [vmem:[#allocation4 + $0x110] sm:$0xff]
        %v476 = vld [vmem:[#allocation4 + $0x118] sm:$0xff]
        %v477 = vld [vmem:[#allocation4 + $0x120] sm:$0xff]
        %v478 = vld [vmem:[#allocation4 + $0x128] sm:$0xff]
        %v479 = vld [vmem:[#allocation4 + $0x130] sm:$0xff]
        %v480 = vld [vmem:[#allocation4 + $0x138] sm:$0xff]
        %v481 = vld [vmem:[#allocation4 + $0x140] sm:$0xff]
        %v482 = vld [vmem:[#allocation4 + $0x148] sm:$0xff]
        %v483 = vld [vmem:[#allocation4 + $0x150] sm:$0xff]
        %v484 = vld [vmem:[#allocation4 + $0x158] sm:$0xff]
        %v485 = vld [vmem:[#allocation4 + $0x160] sm:$0xff]
        %v486 = vld [vmem:[#allocation4 + $0x168] sm:$0xff]
        %v487 = vld [vmem:[#allocation4 + $0x170] sm:$0xff]
        %v488 = vld [vmem:[#allocation4 + $0x178] sm:$0xff]
        %v489 = vld [vmem:[#allocation4 + $0x180] sm:$0xff]
        %v490 = vld [vmem:[#allocation4 + $0x188] sm:$0xff]
        %v491 = vld [vmem:[#allocation4 + $0x190] sm:$0xff]
        %v492 = vld [vmem:[#allocation4 + $0x198] sm:$0xff]
        %v493 = vld [vmem:[#allocation4 + $0x1a0] sm:$0xff]
        %v494 = vld [vmem:[#allocation4 + $0x1a8] sm:$0xff]
        %v495 = vld [vmem:[#allocation4 + $0x1b0] sm:$0xff]
        %v496 = vld [vmem:[#allocation4 + $0x1b8] sm:$0xff]
        %v497 = vld [vmem:[#allocation4 + $0x1c0] sm:$0xff]
        %v498 = vld [vmem:[#allocation4 + $0x1c8] sm:$0xff]
        %v499 = vld [vmem:[#allocation4 + $0x1d0] sm:$0xff]
        %v500 = vld [vmem:[#allocation4 + $0x1d8] sm:$0xff]
        %v501 = vld [vmem:[#allocation4 + $0x1e0] sm:$0xff]
        %v502 = vld [vmem:[#allocation4 + $0x1e8] sm:$0xff]
        %v503 = vld [vmem:[#allocation4 + $0x1f0] sm:$0xff]
        %v504 = vld [vmem:[#allocation4 + $0x1f8] sm:$0xff]
        %v505 = vld [vmem:[#allocation4 + $0x200] sm:$0xff]
        %v506 = vld [vmem:[#allocation4 + $0x208] sm:$0xff]
        %v507 = vld [vmem:[#allocation4 + $0x210] sm:$0xff]
        %v508 = vld [vmem:[#allocation4 + $0x218] sm:$0xff]
        %v509 = vld [vmem:[#allocation4 + $0x220] sm:$0xff]
        %v510 = vld [vmem:[#allocation4 + $0x228] sm:$0xff]
        %v511 = vld [vmem:[#allocation4 + $0x230] sm:$0xff]
        %v512 = vld [vmem:[#allocation4 + $0x238] sm:$0xff]
        %v513 = vld [vmem:[#allocation4 + $0x240] sm:$0xff]
        %v514 = vld [vmem:[#allocation4 + $0x248] sm:$0xff]
        %v515 = vld [vmem:[#allocation4 + $0x250] sm:$0xff]
        %v516 = vld [vmem:[#allocation4 + $0x258] sm:$0xff]
        %v517 = vld [vmem:[#allocation4 + $0x260] sm:$0xff]
        %v518 = vld [vmem:[#allocation4 + $0x268] sm:$0xff]
        %v519 = vld [vmem:[#allocation4 + $0x270] sm:$0xff]
        %v520 = vld [vmem:[#allocation4 + $0x278] sm:$0xff]
        %v521 = vld [vmem:[#allocation4 + $0x280] sm:$0xff]
        %v522 = vld [vmem:[#allocation4 + $0x288] sm:$0xff]
        %v523 = vld [vmem:[#allocation4 + $0x290] sm:$0xff]
        %v524 = vld [vmem:[#allocation4 + $0x298] sm:$0xff]
        %v525 = vld [vmem:[#allocation4 + $0x2a0] sm:$0xff]
        %v526 = vld [vmem:[#allocation4 + $0x2a8] sm:$0xff]
        %v527 = vld [vmem:[#allocation4 + $0x2b0] sm:$0xff]
        %v528 = vld [vmem:[#allocation4 + $0x2b8] sm:$0xff]
        %v529 = vld [vmem:[#allocation4 + $0x2c0] sm:$0xff]
        %v530 = vld [vmem:[#allocation4 + $0x2c8] sm:$0xff]
        %v531 = vld [vmem:[#allocation4 + $0x2d0] sm:$0xff]
        %v532 = vld [vmem:[#allocation4 + $0x2d8] sm:$0xff]
        %v533 = vld [vmem:[#allocation4 + $0x2e0] sm:$0xff]
        %v534 = vld [vmem:[#allocation4 + $0x2e8] sm:$0xff]
        %v535 = vld [vmem:[#allocation4 + $0x2f0] sm:$0xff]
        %v536 = vld [vmem:[#allocation4 + $0x2f8] sm:$0xff]
        %v537 = vld [vmem:[#allocation4 + $0x300] sm:$0xff]
        %v538 = vld [vmem:[#allocation4 + $0x308] sm:$0xff]
        %v539 = vld [vmem:[#allocation6] sm:$0x3]
        %v541 = vlaneseq
        %v542 = vshrl.u32 %v541, 7
        %v543 = vsub.s32 0, %v542
        %v544 = vrot.slane %v539, %v543
        %v545 = vlaneseq
        %v546 = vshrl.u32 %v545, 7
        %v547 = vsub.s32 1, %v546
        %v548 = vrot.slane %v539, %v547
        %v649 = vunpack.c.l.b16 %v441
        %v650 = vunpack.c.h.b16 %v441
        %v651 = vunpack.c.l.b16 %v442
        %v652 = vunpack.c.h.b16 %v442
        %v653 = vunpack.c.l.b16 %v443
        %v654 = vunpack.c.h.b16 %v443
        %v655 = vunpack.c.l.b16 %v444
        %v656 = vunpack.c.h.b16 %v444
        %v657 = vunpack.c.l.b16 %v445
        %v658 = vunpack.c.h.b16 %v445
        %v659 = vunpack.c.l.b16 %v446
        %v660 = vunpack.c.h.b16 %v446
        %v661 = vunpack.c.l.b16 %v447
        %v662 = vunpack.c.h.b16 %v447
        %v663 = vunpack.c.l.b16 %v448
        %v664 = vunpack.c.h.b16 %v448
        %v665 = vunpack.c.l.b16 %v449
        %v666 = vunpack.c.h.b16 %v449
        %v667 = vunpack.c.l.b16 %v450
        %v668 = vunpack.c.h.b16 %v450
        %v669 = vunpack.c.l.b16 %v451
        %v670 = vunpack.c.h.b16 %v451
        %v671 = vunpack.c.l.b16 %v452
        %v672 = vunpack.c.h.b16 %v452
        %v673 = vunpack.c.l.b16 %v453
        %v674 = vunpack.c.h.b16 %v453
        %v675 = vunpack.c.l.b16 %v454
        %v676 = vunpack.c.h.b16 %v454
        %v677 = vunpack.c.l.b16 %v455
        %v678 = vunpack.c.h.b16 %v455
        %v679 = vunpack.c.l.b16 %v456
        %v680 = vunpack.c.h.b16 %v456
        %v681 = vunpack.c.l.b16 %v457
        %v682 = vunpack.c.h.b16 %v457
        %v683 = vunpack.c.l.b16 %v458
        %v684 = vunpack.c.h.b16 %v458
        %v685 = vunpack.c.l.b16 %v459
        %v686 = vunpack.c.h.b16 %v459
        %v687 = vunpack.c.l.b16 %v460
        %v688 = vunpack.c.h.b16 %v460
        %v689 = vunpack.c.l.b16 %v461
        %v690 = vunpack.c.h.b16 %v461
        %v691 = vunpack.c.l.b16 %v462
        %v692 = vunpack.c.h.b16 %v462
        %v693 = vunpack.c.l.b16 %v463
        %v694 = vunpack.c.h.b16 %v463
        %v695 = vunpack.c.l.b16 %v464
        %v696 = vunpack.c.h.b16 %v464
        %v697 = vunpack.c.l.b16 %v465
        %v698 = vunpack.c.h.b16 %v465
        %v699 = vunpack.c.l.b16 %v466
        %v700 = vunpack.c.h.b16 %v466
        %v701 = vunpack.c.l.b16 %v467
        %v702 = vunpack.c.h.b16 %v467
        %v703 = vunpack.c.l.b16 %v468
        %v704 = vunpack.c.h.b16 %v468
        %v705 = vunpack.c.l.b16 %v469
        %v706 = vunpack.c.h.b16 %v469
        %v707 = vunpack.c.l.b16 %v470
        %v708 = vunpack.c.h.b16 %v470
        %v709 = vunpack.c.l.b16 %v471
        %v710 = vunpack.c.h.b16 %v471
        %v711 = vunpack.c.l.b16 %v472
        %v712 = vunpack.c.h.b16 %v472
        %v713 = vunpack.c.l.b16 %v473
        %v714 = vunpack.c.h.b16 %v473
        %v715 = vunpack.c.l.b16 %v474
        %v716 = vunpack.c.h.b16 %v474
        %v717 = vunpack.c.l.b16 %v475
        %v718 = vunpack.c.h.b16 %v475
        %v719 = vunpack.c.l.b16 %v476
        %v720 = vunpack.c.h.b16 %v476
        %v721 = vunpack.c.l.b16 %v477
        %v722 = vunpack.c.h.b16 %v477
        %v723 = vunpack.c.l.b16 %v478
        %v724 = vunpack.c.h.b16 %v478
        %v725 = vunpack.c.l.b16 %v479
        %v726 = vunpack.c.h.b16 %v479
        %v727 = vunpack.c.l.b16 %v480
        %v728 = vunpack.c.h.b16 %v480
        %v729 = vunpack.c.l.b16 %v481
        %v730 = vunpack.c.h.b16 %v481
        %v731 = vunpack.c.l.b16 %v482
        %v732 = vunpack.c.h.b16 %v482
        %v733 = vunpack.c.l.b16 %v483
        %v734 = vunpack.c.h.b16 %v483
        %v735 = vunpack.c.l.b16 %v484
        %v736 = vunpack.c.h.b16 %v484
        %v737 = vunpack.c.l.b16 %v485
        %v738 = vunpack.c.h.b16 %v485
        %v739 = vunpack.c.l.b16 %v486
        %v740 = vunpack.c.h.b16 %v486
        %v741 = vunpack.c.l.b16 %v487
        %v742 = vunpack.c.h.b16 %v487
        %v743 = vunpack.c.l.b16 %v488
        %v744 = vunpack.c.h.b16 %v488
        %v745 = vunpack.c.l.b16 %v489
        %v746 = vunpack.c.h.b16 %v489
        %v747 = vunpack.c.l.b16 %v490
        %v748 = vunpack.c.h.b16 %v490
        %v749 = vunpack.c.l.b16 %v491
        %v750 = vunpack.c.h.b16 %v491
        %v751 = vunpack.c.l.b16 %v492
        %v752 = vunpack.c.h.b16 %v492
        %v753 = vunpack.c.l.b16 %v493
        %v754 = vunpack.c.h.b16 %v493
        %v755 = vunpack.c.l.b16 %v494
        %v756 = vunpack.c.h.b16 %v494
        %v757 = vunpack.c.l.b16 %v495
        %v758 = vunpack.c.h.b16 %v495
        %v759 = vunpack.c.l.b16 %v496
        %v760 = vunpack.c.h.b16 %v496
        %v761 = vunpack.c.l.b16 %v497
        %v762 = vunpack.c.h.b16 %v497
        %v763 = vunpack.c.l.b16 %v498
        %v764 = vunpack.c.h.b16 %v498
        %v765 = vunpack.c.l.b16 %v499
        %v766 = vunpack.c.h.b16 %v499
        %v767 = vunpack.c.l.b16 %v500
        %v768 = vunpack.c.h.b16 %v500
        %v769 = vunpack.c.l.b16 %v501
        %v770 = vunpack.c.h.b16 %v501
        %v771 = vunpack.c.l.b16 %v502
        %v772 = vunpack.c.h.b16 %v502
        %v773 = vunpack.c.l.b16 %v503
        %v774 = vunpack.c.h.b16 %v503
        %v775 = vunpack.c.l.b16 %v504
        %v776 = vunpack.c.h.b16 %v504
        %v777 = vunpack.c.l.b16 %v505
        %v778 = vunpack.c.h.b16 %v505
        %v779 = vunpack.c.l.b16 %v506
        %v780 = vunpack.c.h.b16 %v506
        %v781 = vunpack.c.l.b16 %v507
        %v782 = vunpack.c.h.b16 %v507
        %v783 = vunpack.c.l.b16 %v508
        %v784 = vunpack.c.h.b16 %v508
        %v785 = vunpack.c.l.b16 %v509
        %v786 = vunpack.c.h.b16 %v509
        %v787 = vunpack.c.l.b16 %v510
        %v788 = vunpack.c.h.b16 %v510
        %v789 = vunpack.c.l.b16 %v511
        %v790 = vunpack.c.h.b16 %v511
        %v791 = vunpack.c.l.b16 %v512
        %v792 = vunpack.c.h.b16 %v512
        %v793 = vunpack.c.l.b16 %v513
        %v794 = vunpack.c.h.b16 %v513
        %v795 = vunpack.c.l.b16 %v514
        %v796 = vunpack.c.h.b16 %v514
        %v797 = vunpack.c.l.b16 %v515
        %v798 = vunpack.c.h.b16 %v515
        %v799 = vunpack.c.l.b16 %v516
        %v800 = vunpack.c.h.b16 %v516
        %v801 = vunpack.c.l.b16 %v517
        %v802 = vunpack.c.h.b16 %v517
        %v803 = vunpack.c.l.b16 %v518
        %v804 = vunpack.c.h.b16 %v518
        %v805 = vunpack.c.l.b16 %v519
        %v806 = vunpack.c.h.b16 %v519
        %v807 = vunpack.c.l.b16 %v520
        %v808 = vunpack.c.h.b16 %v520
        %v809 = vunpack.c.l.b16 %v521
        %v810 = vunpack.c.h.b16 %v521
        %v811 = vunpack.c.l.b16 %v522
        %v812 = vunpack.c.h.b16 %v522
        %v813 = vunpack.c.l.b16 %v523
        %v814 = vunpack.c.h.b16 %v523
        %v815 = vunpack.c.l.b16 %v524
        %v816 = vunpack.c.h.b16 %v524
        %v817 = vunpack.c.l.b16 %v525
        %v818 = vunpack.c.h.b16 %v525
        %v819 = vunpack.c.l.b16 %v526
        %v820 = vunpack.c.h.b16 %v526
        %v821 = vunpack.c.l.b16 %v527
        %v822 = vunpack.c.h.b16 %v527
        %v823 = vunpack.c.l.b16 %v528
        %v824 = vunpack.c.h.b16 %v528
        %v825 = vunpack.c.l.b16 %v529
        %v826 = vunpack.c.h.b16 %v529
        %v827 = vunpack.c.l.b16 %v530
        %v828 = vunpack.c.h.b16 %v530
        %v829 = vunpack.c.l.b16 %v531
        %v830 = vunpack.c.h.b16 %v531
        %v831 = vunpack.c.l.b16 %v532
        %v832 = vunpack.c.h.b16 %v532
        %v833 = vunpack.c.l.b16 %v533
        %v834 = vunpack.c.h.b16 %v533
        %v835 = vunpack.c.l.b16 %v534
        %v836 = vunpack.c.h.b16 %v534
        %v837 = vunpack.c.l.b16 %v535
        %v838 = vunpack.c.h.b16 %v535
        %v839 = vunpack.c.l.b16 %v536
        %v840 = vunpack.c.h.b16 %v536
        %v841 = vunpack.c.l.b16 %v537
        %v842 = vunpack.c.h.b16 %v537
        %v843 = vunpack.c.l.b16 %v538
        %v844 = vunpack.c.h.b16 %v538
        %v845 = vpack.c.b16 %v651, %v649
        %v846 = vpack.c.b16 %v652, %v650
        %v847 = vpack.c.b16 %v655, %v653
        %v848 = vpack.c.b16 %v656, %v654
        %v849 = vpack.c.b16 %v659, %v657
        %v850 = vpack.c.b16 %v660, %v658
        %v851 = vpack.c.b16 %v663, %v661
        %v852 = vpack.c.b16 %v664, %v662
        %v853 = vpack.c.b16 %v667, %v665
        %v854 = vpack.c.b16 %v668, %v666
        %v855 = vpack.c.b16 %v671, %v669
        %v856 = vpack.c.b16 %v672, %v670
        %v857 = vpack.c.b16 %v675, %v673
        %v858 = vpack.c.b16 %v676, %v674
        %v859 = vpack.c.b16 %v679, %v677
        %v860 = vpack.c.b16 %v680, %v678
        %v861 = vpack.c.b16 %v683, %v681
        %v862 = vpack.c.b16 %v684, %v682
        %v863 = vpack.c.b16 %v687, %v685
        %v864 = vpack.c.b16 %v688, %v686
        %v865 = vpack.c.b16 %v691, %v689
        %v866 = vpack.c.b16 %v692, %v690
        %v867 = vpack.c.b16 %v695, %v693
        %v868 = vpack.c.b16 %v696, %v694
        %v869 = vpack.c.b16 %v699, %v697
        %v870 = vpack.c.b16 %v700, %v698
        %v871 = vpack.c.b16 %v703, %v701
        %v872 = vpack.c.b16 %v704, %v702
        %v873 = vpack.c.b16 %v707, %v705
        %v874 = vpack.c.b16 %v708, %v706
        %v875 = vpack.c.b16 %v711, %v709
        %v876 = vpack.c.b16 %v712, %v710
        %v877 = vpack.c.b16 %v715, %v713
        %v878 = vpack.c.b16 %v716, %v714
        %v879 = vpack.c.b16 %v719, %v717
        %v880 = vpack.c.b16 %v720, %v718
        %v881 = vpack.c.b16 %v723, %v721
        %v882 = vpack.c.b16 %v724, %v722
        %v883 = vpack.c.b16 %v727, %v725
        %v884 = vpack.c.b16 %v728, %v726
        %v885 = vpack.c.b16 %v731, %v729
        %v886 = vpack.c.b16 %v732, %v730
        %v887 = vpack.c.b16 %v735, %v733
        %v888 = vpack.c.b16 %v736, %v734
        %v889 = vpack.c.b16 %v739, %v737
        %v890 = vpack.c.b16 %v740, %v738
        %v891 = vpack.c.b16 %v743, %v741
        %v892 = vpack.c.b16 %v744, %v742
        %v893 = vpack.c.b16 %v747, %v745
        %v894 = vpack.c.b16 %v748, %v746
        %v895 = vpack.c.b16 %v751, %v749
        %v896 = vpack.c.b16 %v752, %v750
        %v897 = vpack.c.b16 %v755, %v753
        %v898 = vpack.c.b16 %v756, %v754
        %v899 = vpack.c.b16 %v759, %v757
        %v900 = vpack.c.b16 %v760, %v758
        %v901 = vpack.c.b16 %v763, %v761
        %v902 = vpack.c.b16 %v764, %v762
        %v903 = vpack.c.b16 %v767, %v765
        %v904 = vpack.c.b16 %v768, %v766
        %v905 = vpack.c.b16 %v771, %v769
        %v906 = vpack.c.b16 %v772, %v770
        %v907 = vpack.c.b16 %v775, %v773
        %v908 = vpack.c.b16 %v776, %v774
        %v909 = vpack.c.b16 %v779, %v777
        %v910 = vpack.c.b16 %v780, %v778
        %v911 = vpack.c.b16 %v783, %v781
        %v912 = vpack.c.b16 %v784, %v782
        %v913 = vpack.c.b16 %v787, %v785
        %v914 = vpack.c.b16 %v788, %v786
        %v915 = vpack.c.b16 %v791, %v789
        %v916 = vpack.c.b16 %v792, %v790
        %v917 = vpack.c.b16 %v795, %v793
        %v918 = vpack.c.b16 %v796, %v794
        %v919 = vpack.c.b16 %v799, %v797
        %v920 = vpack.c.b16 %v800, %v798
        %v921 = vpack.c.b16 %v803, %v801
        %v922 = vpack.c.b16 %v804, %v802
        %v923 = vpack.c.b16 %v807, %v805
        %v924 = vpack.c.b16 %v808, %v806
        %v925 = vpack.c.b16 %v811, %v809
        %v926 = vpack.c.b16 %v812, %v810
        %v927 = vpack.c.b16 %v815, %v813
        %v928 = vpack.c.b16 %v816, %v814
        %v929 = vpack.c.b16 %v819, %v817
        %v930 = vpack.c.b16 %v820, %v818
        %v931 = vpack.c.b16 %v823, %v821
        %v932 = vpack.c.b16 %v824, %v822
        %v933 = vpack.c.b16 %v827, %v825
        %v934 = vpack.c.b16 %v828, %v826
        %v935 = vpack.c.b16 %v831, %v829
        %v936 = vpack.c.b16 %v832, %v830
        %v937 = vpack.c.b16 %v835, %v833
        %v938 = vpack.c.b16 %v836, %v834
        %v939 = vpack.c.b16 %v839, %v837
        %v940 = vpack.c.b16 %v840, %v838
        %v941 = vpack.c.b16 %v843, %v841
        %v942 = vpack.c.b16 %v844, %v842
        %vm1041 = vcmask 130048
        %v1043 = vsel %vm1041, %v398, 0
        %v1046 = vsel %vm1041, %v405, 0
        %v1049 = vsel %vm1041, %v412, 0
        %v1052 = vsel %vm1041, %v419, 0
        %v1055 = vsel %vm1041, %v426, 0
        %v1058 = vsel %vm1041, %v433, 0
        %v1061 = vsel %vm1041, %v440, 0
        %1063 = vmatprep.subr.bf16.mxu0 %v860
        %1064 = vmatpush1.bf16.msra.mxu0 %v859
        %1065 = vmatprep.subr.bf16.mxu0 %v858
        %1066 = vmatpush1.bf16.msra.mxu0 %v857
        %1067 = vmatprep.subr.bf16.mxu0 %v856
        %1068 = vmatpush1.bf16.msra.mxu0 %v855
        %1069 = vmatprep.subr.bf16.mxu0 %v854
        %1070 = vmatpush1.bf16.msra.mxu0 %v853
        %1071 = vmatprep.subr.bf16.mxu0 %v852
        %1072 = vmatpush1.bf16.msra.mxu0 %v851
        %1073 = vmatprep.subr.bf16.mxu0 %v850
        %1074 = vmatpush1.bf16.msra.mxu0 %v849
        %1075 = vmatprep.subr.bf16.mxu0 %v848
        %1076 = vmatpush1.bf16.msra.mxu0 %v847
        %1077 = vmatprep.subr.bf16.mxu0 %v846
        %1078 = vmatpush1.bf16.msra.mxu0 %v845
        %1079 = vmatprep.subr.bf16.mxu0 %v876
        %1080 = vmatpush2.bf16.msra.mxu0 %v875
        %1081 = vmatprep.subr.bf16.mxu0 %v874
        %1082 = vmatpush2.bf16.msra.mxu0 %v873
        %1083 = vmatprep.subr.bf16.mxu0 %v872
        %1084 = vmatpush2.bf16.msra.mxu0 %v871
        %1085 = vmatprep.subr.bf16.mxu0 %v870
        %1086 = vmatpush2.bf16.msra.mxu0 %v869
        %1087 = vmatprep.subr.bf16.mxu0 %v868
        %1088 = vmatpush2.bf16.msra.mxu0 %v867
        %1089 = vmatprep.subr.bf16.mxu0 %v866
        %1090 = vmatpush2.bf16.msra.mxu0 %v865
        %1091 = vmatprep.subr.bf16.mxu0 %v864
        %1092 = vmatpush2.bf16.msra.mxu0 %v863
        %1093 = vmatprep.subr.bf16.mxu0 %v862
        %1094 = vmatpush2.bf16.msra.mxu0 %v861
        %1095 = vmatprep.mubr.bf16.mxu0 %v393
        %1096 = vmatmul.mubr.bf16.gmra.mxu0 %v392
        %v1097 = vpop.f32.mrf.mxu0
        %v1098 = vadd.f32 %v544, %v1097
        %v1099 = vpop.f32.mrf.mxu0
        %v1100 = vadd.f32 %v548, %v1099
        %v1101 = vpop.f32.mrf.mxu0
        %v1102 = vadd.f32 %v544, %v1101
        %v1103 = vpop.f32.mrf.mxu0
        %v1104 = vadd.f32 %v548, %v1103
        %1105 = vmatprep.mubr.bf16.mxu0 %v400
        %1106 = vmatmul.mubr.bf16.gmra.mxu0 %v399
        %v1107 = vpop.f32.mrf.mxu0
        %v1108 = vadd.f32 %v544, %v1107
        %v1109 = vpop.f32.mrf.mxu0
        %v1110 = vadd.f32 %v548, %v1109
        %v1111 = vpop.f32.mrf.mxu0
        %v1112 = vadd.f32 %v544, %v1111
        %v1113 = vpop.f32.mrf.mxu0
        %v1114 = vadd.f32 %v548, %v1113
        %1115 = vmatprep.mubr.bf16.mxu0 %v407
        %1116 = vmatmul.mubr.bf16.gmra.mxu0 %v406
        %v1117 = vpop.f32.mrf.mxu0
        %v1118 = vadd.f32 %v544, %v1117
        %v1119 = vpop.f32.mrf.mxu0
        %v1120 = vadd.f32 %v548, %v1119
        %v1121 = vpop.f32.mrf.mxu0
        %v1122 = vadd.f32 %v544, %v1121
        %v1123 = vpop.f32.mrf.mxu0
        %v1124 = vadd.f32 %v548, %v1123
        %1125 = vmatprep.mubr.bf16.mxu0 %v414
        %1126 = vmatmul.mubr.bf16.gmra.mxu0 %v413
        %v1127 = vpop.f32.mrf.mxu0
        %v1128 = vadd.f32 %v544, %v1127
        %v1129 = vpop.f32.mrf.mxu0
        %v1130 = vadd.f32 %v548, %v1129
        %v1131 = vpop.f32.mrf.mxu0
        %v1132 = vadd.f32 %v544, %v1131
        %v1133 = vpop.f32.mrf.mxu0
        %v1134 = vadd.f32 %v548, %v1133
        %1135 = vmatprep.mubr.bf16.mxu0 %v421
        %1136 = vmatmul.mubr.bf16.gmra.mxu0 %v420
        %v1137 = vpop.f32.mrf.mxu0
        %v1138 = vadd.f32 %v544, %v1137
        %v1139 = vpop.f32.mrf.mxu0
        %v1140 = vadd.f32 %v548, %v1139
        %v1141 = vpop.f32.mrf.mxu0
        %v1142 = vadd.f32 %v544, %v1141
        %v1143 = vpop.f32.mrf.mxu0
        %v1144 = vadd.f32 %v548, %v1143
        %1145 = vmatprep.mubr.bf16.mxu0 %v428
        %1146 = vmatmul.mubr.bf16.gmra.mxu0 %v427
        %v1147 = vpop.f32.mrf.mxu0
        %v1148 = vadd.f32 %v544, %v1147
        %v1149 = vpop.f32.mrf.mxu0
        %v1150 = vadd.f32 %v548, %v1149
        %v1151 = vpop.f32.mrf.mxu0
        %v1152 = vadd.f32 %v544, %v1151
        %v1153 = vpop.f32.mrf.mxu0
        %v1154 = vadd.f32 %v548, %v1153
        %1155 = vmatprep.mubr.bf16.mxu0 %v435
        %1156 = vmatmul.mubr.bf16.gmra.mxu0 %v434
        %v1157 = vpop.f32.mrf.mxu0
        %v1158 = vadd.f32 %v544, %v1157
        %v1159 = vpop.f32.mrf.mxu0
        %v1160 = vadd.f32 %v548, %v1159
        %v1161 = vpop.f32.mrf.mxu0
        %v1162 = vpop.f32.mrf.mxu0
        %1163 = vdwg.mxu0
        %1164 = vmatprep.subr.bf16.mxu0 %v892
        %1165 = vmatpush1.bf16.msra.mxu0 %v891
        %1166 = vmatprep.subr.bf16.mxu0 %v890
        %1167 = vmatpush1.bf16.msra.mxu0 %v889
        %1168 = vmatprep.subr.bf16.mxu0 %v888
        %1169 = vmatpush1.bf16.msra.mxu0 %v887
        %1170 = vmatprep.subr.bf16.mxu0 %v886
        %1171 = vmatpush1.bf16.msra.mxu0 %v885
        %1172 = vmatprep.subr.bf16.mxu0 %v884
        %1173 = vmatpush1.bf16.msra.mxu0 %v883
        %1174 = vmatprep.subr.bf16.mxu0 %v882
        %1175 = vmatpush1.bf16.msra.mxu0 %v881
        %1176 = vmatprep.subr.bf16.mxu0 %v880
        %1177 = vmatpush1.bf16.msra.mxu0 %v879
        %1178 = vmatprep.subr.bf16.mxu0 %v878
        %1179 = vmatpush1.bf16.msra.mxu0 %v877
        %1180 = vmatprep.subr.bf16.mxu0 %v908
        %1181 = vmatpush2.bf16.msra.mxu0 %v907
        %1182 = vmatprep.subr.bf16.mxu0 %v906
        %1183 = vmatpush2.bf16.msra.mxu0 %v905
        %1184 = vmatprep.subr.bf16.mxu0 %v904
        %1185 = vmatpush2.bf16.msra.mxu0 %v903
        %1186 = vmatprep.subr.bf16.mxu0 %v902
        %1187 = vmatpush2.bf16.msra.mxu0 %v901
        %1188 = vmatprep.subr.bf16.mxu0 %v900
        %1189 = vmatpush2.bf16.msra.mxu0 %v899
        %1190 = vmatprep.subr.bf16.mxu0 %v898
        %1191 = vmatpush2.bf16.msra.mxu0 %v897
        %1192 = vmatprep.subr.bf16.mxu0 %v896
        %1193 = vmatpush2.bf16.msra.mxu0 %v895
        %1194 = vmatprep.subr.bf16.mxu0 %v894
        %1195 = vmatpush2.bf16.msra.mxu0 %v893
        %1196 = vmatprep.mubr.bf16.mxu0 %v395
        %1197 = vmatmul.mubr.bf16.gmra.mxu0 %v394
        %v1198 = vpop.f32.mrf.mxu0
        %v1199 = vadd.f32 %v1098, %v1198
        %v1200 = vpop.f32.mrf.mxu0
        %v1201 = vadd.f32 %v1100, %v1200
        %v1202 = vpop.f32.mrf.mxu0
        %v1203 = vadd.f32 %v1102, %v1202
        %v1204 = vpop.f32.mrf.mxu0
        %v1205 = vadd.f32 %v1104, %v1204
        %1206 = vmatprep.mubr.bf16.mxu0 %v402
        %1207 = vmatmul.mubr.bf16.gmra.mxu0 %v401
        %v1208 = vpop.f32.mrf.mxu0
        %v1209 = vadd.f32 %v1108, %v1208
        %v1210 = vpop.f32.mrf.mxu0
        %v1211 = vadd.f32 %v1110, %v1210
        %v1212 = vpop.f32.mrf.mxu0
        %v1213 = vadd.f32 %v1112, %v1212
        %v1214 = vpop.f32.mrf.mxu0
        %v1215 = vadd.f32 %v1114, %v1214
        %1216 = vmatprep.mubr.bf16.mxu0 %v409
        %1217 = vmatmul.mubr.bf16.gmra.mxu0 %v408
        %v1218 = vpop.f32.mrf.mxu0
        %v1219 = vadd.f32 %v1118, %v1218
        %v1220 = vpop.f32.mrf.mxu0
        %v1221 = vadd.f32 %v1120, %v1220
        %v1222 = vpop.f32.mrf.mxu0
        %v1223 = vadd.f32 %v1122, %v1222
        %v1224 = vpop.f32.mrf.mxu0
        %v1225 = vadd.f32 %v1124, %v1224
        %1226 = vmatprep.mubr.bf16.mxu0 %v416
        %1227 = vmatmul.mubr.bf16.gmra.mxu0 %v415
        %v1228 = vpop.f32.mrf.mxu0
        %v1229 = vadd.f32 %v1128, %v1228
        %v1230 = vpop.f32.mrf.mxu0
        %v1231 = vadd.f32 %v1130, %v1230
        %v1232 = vpop.f32.mrf.mxu0
        %v1233 = vadd.f32 %v1132, %v1232
        %v1234 = vpop.f32.mrf.mxu0
        %v1235 = vadd.f32 %v1134, %v1234
        %1236 = vmatprep.mubr.bf16.mxu0 %v423
        %1237 = vmatmul.mubr.bf16.gmra.mxu0 %v422
        %v1238 = vpop.f32.mrf.mxu0
        %v1239 = vadd.f32 %v1138, %v1238
        %v1240 = vpop.f32.mrf.mxu0
        %v1241 = vadd.f32 %v1140, %v1240
        %v1242 = vpop.f32.mrf.mxu0
        %v1243 = vadd.f32 %v1142, %v1242
        %v1244 = vpop.f32.mrf.mxu0
        %v1245 = vadd.f32 %v1144, %v1244
        %1246 = vmatprep.mubr.bf16.mxu0 %v430
        %1247 = vmatmul.mubr.bf16.gmra.mxu0 %v429
        %v1248 = vpop.f32.mrf.mxu0
        %v1249 = vadd.f32 %v1148, %v1248
        %v1250 = vpop.f32.mrf.mxu0
        %v1251 = vadd.f32 %v1150, %v1250
        %v1252 = vpop.f32.mrf.mxu0
        %v1253 = vadd.f32 %v1152, %v1252
        %v1254 = vpop.f32.mrf.mxu0
        %v1255 = vadd.f32 %v1154, %v1254
        %1256 = vmatprep.mubr.bf16.mxu0 %v437
        %1257 = vmatmul.mubr.bf16.gmra.mxu0 %v436
        %v1258 = vpop.f32.mrf.mxu0
        %v1259 = vadd.f32 %v1158, %v1258
        %v1260 = vpop.f32.mrf.mxu0
        %v1261 = vadd.f32 %v1160, %v1260
        %v1262 = vpop.f32.mrf.mxu0
        %v1263 = vpop.f32.mrf.mxu0
        %1264 = vdwg.mxu0
        %1265 = vmatprep.subr.bf16.mxu0 %v924
        %1266 = vmatpush1.bf16.msra.mxu0 %v923
        %1267 = vmatprep.subr.bf16.mxu0 %v922
        %1268 = vmatpush1.bf16.msra.mxu0 %v921
        %1269 = vmatprep.subr.bf16.mxu0 %v920
        %1270 = vmatpush1.bf16.msra.mxu0 %v919
        %1271 = vmatprep.subr.bf16.mxu0 %v918
        %1272 = vmatpush1.bf16.msra.mxu0 %v917
        %1273 = vmatprep.subr.bf16.mxu0 %v916
        %1274 = vmatpush1.bf16.msra.mxu0 %v915
        %1275 = vmatprep.subr.bf16.mxu0 %v914
        %1276 = vmatpush1.bf16.msra.mxu0 %v913
        %1277 = vmatprep.subr.bf16.mxu0 %v912
        %1278 = vmatpush1.bf16.msra.mxu0 %v911
        %1279 = vmatprep.subr.bf16.mxu0 %v910
        %1280 = vmatpush1.bf16.msra.mxu0 %v909
        %1281 = vmatprep.subr.bf16.mxu0 %v940
        %1282 = vmatpush2.bf16.msra.mxu0 %v939
        %1283 = vmatprep.subr.bf16.mxu0 %v938
        %1284 = vmatpush2.bf16.msra.mxu0 %v937
        %1285 = vmatprep.subr.bf16.mxu0 %v936
        %1286 = vmatpush2.bf16.msra.mxu0 %v935
        %1287 = vmatprep.subr.bf16.mxu0 %v934
        %1288 = vmatpush2.bf16.msra.mxu0 %v933
        %1289 = vmatprep.subr.bf16.mxu0 %v932
        %1290 = vmatpush2.bf16.msra.mxu0 %v931
        %1291 = vmatprep.subr.bf16.mxu0 %v930
        %1292 = vmatpush2.bf16.msra.mxu0 %v929
        %1293 = vmatprep.subr.bf16.mxu0 %v928
        %1294 = vmatpush2.bf16.msra.mxu0 %v927
        %1295 = vmatprep.subr.bf16.mxu0 %v926
        %1296 = vmatpush2.bf16.msra.mxu0 %v925
        %1297 = vmatprep.mubr.bf16.mxu0 %v397
        %1298 = vmatmul.mubr.bf16.gmra.mxu0 %v396
        %v1299 = vpop.f32.mrf.mxu0
        %v1300 = vadd.f32 %v1199, %v1299
        %v1301 = vpop.f32.mrf.mxu0
        %v1302 = vadd.f32 %v1201, %v1301
        %v1303 = vpop.f32.mrf.mxu0
        %v1304 = vadd.f32 %v1203, %v1303
        %v1305 = vpop.f32.mrf.mxu0
        %v1306 = vadd.f32 %v1205, %v1305
        %1307 = vmatprep.mubr.bf16.mxu0 %v404
        %1308 = vmatmul.mubr.bf16.gmra.mxu0 %v403
        %v1309 = vpop.f32.mrf.mxu0
        %v1310 = vadd.f32 %v1209, %v1309
        %v1311 = vpop.f32.mrf.mxu0
        %v1312 = vadd.f32 %v1211, %v1311
        %v1313 = vpop.f32.mrf.mxu0
        %v1314 = vadd.f32 %v1213, %v1313
        %v1315 = vpop.f32.mrf.mxu0
        %v1316 = vadd.f32 %v1215, %v1315
        %1317 = vmatprep.mubr.bf16.mxu0 %v411
        %1318 = vmatmul.mubr.bf16.gmra.mxu0 %v410
        %v1319 = vpop.f32.mrf.mxu0
        %v1320 = vadd.f32 %v1219, %v1319
        %v1321 = vpop.f32.mrf.mxu0
        %v1322 = vadd.f32 %v1221, %v1321
        %v1323 = vpop.f32.mrf.mxu0
        %v1324 = vadd.f32 %v1223, %v1323
        %v1325 = vpop.f32.mrf.mxu0
        %v1326 = vadd.f32 %v1225, %v1325
        %1327 = vmatprep.mubr.bf16.mxu0 %v418
        %1328 = vmatmul.mubr.bf16.gmra.mxu0 %v417
        %v1329 = vpop.f32.mrf.mxu0
        %v1330 = vadd.f32 %v1229, %v1329
        %v1331 = vpop.f32.mrf.mxu0
        %v1332 = vadd.f32 %v1231, %v1331
        %v1333 = vpop.f32.mrf.mxu0
        %v1334 = vadd.f32 %v1233, %v1333
        %v1335 = vpop.f32.mrf.mxu0
        %v1336 = vadd.f32 %v1235, %v1335
        %1337 = vmatprep.mubr.bf16.mxu0 %v425
        %1338 = vmatmul.mubr.bf16.gmra.mxu0 %v424
        %v1339 = vpop.f32.mrf.mxu0
        %v1340 = vadd.f32 %v1239, %v1339
        %v1341 = vpop.f32.mrf.mxu0
        %v1342 = vadd.f32 %v1241, %v1341
        %v1343 = vpop.f32.mrf.mxu0
        %v1344 = vadd.f32 %v1243, %v1343
        %v1345 = vpop.f32.mrf.mxu0
        %v1346 = vadd.f32 %v1245, %v1345
        %1347 = vmatprep.mubr.bf16.mxu0 %v432
        %1348 = vmatmul.mubr.bf16.gmra.mxu0 %v431
        %v1349 = vpop.f32.mrf.mxu0
        %v1350 = vadd.f32 %v1249, %v1349
        %v1351 = vpop.f32.mrf.mxu0
        %v1352 = vadd.f32 %v1251, %v1351
        %v1353 = vpop.f32.mrf.mxu0
        %v1354 = vadd.f32 %v1253, %v1353
        %v1355 = vpop.f32.mrf.mxu0
        %v1356 = vadd.f32 %v1255, %v1355
        %1357 = vmatprep.mubr.bf16.mxu0 %v439
        %1358 = vmatmul.mubr.bf16.gmra.mxu0 %v438
        %v1359 = vpop.f32.mrf.mxu0
        %v1360 = vadd.f32 %v1259, %v1359
        %v1361 = vpop.f32.mrf.mxu0
        %v1362 = vadd.f32 %v1261, %v1361
        %v1363 = vpop.f32.mrf.mxu0
        %v1364 = vpop.f32.mrf.mxu0
        %1365 = vdwg.mxu0
        %1366 = vmatprep.subr.bf16.mxu0 0
        %1367 = vmatpush1.bf16.msra.mxu0 0
        %1368 = vmatprep.subr.bf16.mxu0 0
        %1369 = vmatpush1.bf16.msra.mxu0 0
        %1370 = vmatprep.subr.bf16.mxu0 0
        %1371 = vmatpush1.bf16.msra.mxu0 0
        %1372 = vmatprep.subr.bf16.mxu0 0
        %1373 = vmatpush1.bf16.msra.mxu0 0
        %1374 = vmatprep.subr.bf16.mxu0 0
        %1375 = vmatpush1.bf16.msra.mxu0 0
        %1376 = vmatprep.subr.bf16.mxu0 0
        %1377 = vmatpush1.bf16.msra.mxu0 0
        %1378 = vmatprep.subr.bf16.mxu0 0
        %1379 = vmatpush1.bf16.msra.mxu0 0
        %1380 = vmatprep.subr.bf16.mxu0 %v942
        %1381 = vmatpush1.bf16.msra.mxu0 %v941
        %1382 = vmatprep.subr.bf16.mxu0 0
        %1383 = vmatpush2.bf16.msra.mxu0 0
        %1384 = vmatprep.subr.bf16.mxu0 0
        %1385 = vmatpush2.bf16.msra.mxu0 0
        %1386 = vmatprep.subr.bf16.mxu0 0
        %1387 = vmatpush2.bf16.msra.mxu0 0
        %1388 = vmatprep.subr.bf16.mxu0 0
        %1389 = vmatpush2.bf16.msra.mxu0 0
        %1390 = vmatprep.subr.bf16.mxu0 0
        %1391 = vmatpush2.bf16.msra.mxu0 0
        %1392 = vmatprep.subr.bf16.mxu0 0
        %1393 = vmatpush2.bf16.msra.mxu0 0
        %1394 = vmatprep.subr.bf16.mxu0 0
        %1395 = vmatpush2.bf16.msra.mxu0 0
        %1396 = vmatprep.subr.bf16.mxu0 0
        %1397 = vmatpush2.bf16.msra.mxu0 0
        %1398 = vmatprep.mubr.bf16.mxu0 0
        %1399 = vmatmul.mubr.bf16.gmra.mxu0 %v1043
        %v1400 = vpop.f32.mrf.mxu0
        %v1401 = vadd.f32 %v1300, %v1400
        %v1402 = vpop.f32.mrf.mxu0
        %v1403 = vadd.f32 %v1302, %v1402
        %v1404 = vpop.f32.mrf.mxu0
        %v1405 = vadd.f32 %v1304, %v1404
        %v1406 = vpop.f32.mrf.mxu0
        %v1407 = vadd.f32 %v1306, %v1406
        %1408 = vmatprep.mubr.bf16.mxu0 0
        %1409 = vmatmul.mubr.bf16.gmra.mxu0 %v1046
        %v1410 = vpop.f32.mrf.mxu0
        %v1411 = vadd.f32 %v1310, %v1410
        %v1412 = vpop.f32.mrf.mxu0
        %v1413 = vadd.f32 %v1312, %v1412
        %v1414 = vpop.f32.mrf.mxu0
        %v1415 = vadd.f32 %v1314, %v1414
        %v1416 = vpop.f32.mrf.mxu0
        %v1417 = vadd.f32 %v1316, %v1416
        %1418 = vmatprep.mubr.bf16.mxu0 0
        %1419 = vmatmul.mubr.bf16.gmra.mxu0 %v1049
        %v1420 = vpop.f32.mrf.mxu0
        %v1421 = vadd.f32 %v1320, %v1420
        %v1422 = vpop.f32.mrf.mxu0
        %v1423 = vadd.f32 %v1322, %v1422
        %v1424 = vpop.f32.mrf.mxu0
        %v1425 = vadd.f32 %v1324, %v1424
        %v1426 = vpop.f32.mrf.mxu0
        %v1427 = vadd.f32 %v1326, %v1426
        %1428 = vmatprep.mubr.bf16.mxu0 0
        %1429 = vmatmul.mubr.bf16.gmra.mxu0 %v1052
        %v1430 = vpop.f32.mrf.mxu0
        %v1431 = vadd.f32 %v1330, %v1430
        %v1432 = vpop.f32.mrf.mxu0
        %v1433 = vadd.f32 %v1332, %v1432
        %v1434 = vpop.f32.mrf.mxu0
        %v1435 = vadd.f32 %v1334, %v1434
        %v1436 = vpop.f32.mrf.mxu0
        %v1437 = vadd.f32 %v1336, %v1436
        %1438 = vmatprep.mubr.bf16.mxu0 0
        %1439 = vmatmul.mubr.bf16.gmra.mxu0 %v1055
        %v1440 = vpop.f32.mrf.mxu0
        %v1441 = vadd.f32 %v1340, %v1440
        %v1442 = vpop.f32.mrf.mxu0
        %v1443 = vadd.f32 %v1342, %v1442
        %v1444 = vpop.f32.mrf.mxu0
        %v1445 = vadd.f32 %v1344, %v1444
        %v1446 = vpop.f32.mrf.mxu0
        %v1447 = vadd.f32 %v1346, %v1446
        %1448 = vmatprep.mubr.bf16.mxu0 0
        %1449 = vmatmul.mubr.bf16.gmra.mxu0 %v1058
        %v1450 = vpop.f32.mrf.mxu0
        %v1451 = vadd.f32 %v1350, %v1450
        %v1452 = vpop.f32.mrf.mxu0
        %v1453 = vadd.f32 %v1352, %v1452
        %v1454 = vpop.f32.mrf.mxu0
        %v1455 = vadd.f32 %v1354, %v1454
        %v1456 = vpop.f32.mrf.mxu0
        %v1457 = vadd.f32 %v1356, %v1456
        %1458 = vmatprep.mubr.bf16.mxu0 0
        %1459 = vmatmul.mubr.bf16.gmra.mxu0 %v1061
        %v1460 = vpop.f32.mrf.mxu0
        %v1461 = vadd.f32 %v1360, %v1460
        %v1462 = vpop.f32.mrf.mxu0
        %v1463 = vadd.f32 %v1362, %v1462
        %v1464 = vpop.f32.mrf.mxu0
        %v1465 = vpop.f32.mrf.mxu0
        %1466 = vdwg.mxu0
        %v1467 = vmax.f32 %v1401, 0.0
        %v1468 = vmax.f32 %v1403, 0.0
        %v1469 = vmax.f32 %v1405, 0.0
        %v1470 = vmax.f32 %v1407, 0.0
        %v1471 = vmax.f32 %v1411, 0.0
        %v1472 = vmax.f32 %v1413, 0.0
        %v1473 = vmax.f32 %v1415, 0.0
        %v1474 = vmax.f32 %v1417, 0.0
        %v1475 = vmax.f32 %v1421, 0.0
        %v1476 = vmax.f32 %v1423, 0.0
        %v1477 = vmax.f32 %v1425, 0.0
        %v1478 = vmax.f32 %v1427, 0.0
        %v1479 = vmax.f32 %v1431, 0.0
        %v1480 = vmax.f32 %v1433, 0.0
        %v1481 = vmax.f32 %v1435, 0.0
        %v1482 = vmax.f32 %v1437, 0.0
        %v1483 = vmax.f32 %v1441, 0.0
        %v1484 = vmax.f32 %v1443, 0.0
        %v1485 = vmax.f32 %v1445, 0.0
        %v1486 = vmax.f32 %v1447, 0.0
        %v1487 = vmax.f32 %v1451, 0.0
        %v1488 = vmax.f32 %v1453, 0.0
        %v1489 = vmax.f32 %v1455, 0.0
        %v1490 = vmax.f32 %v1457, 0.0
        %v1491 = vmax.f32 %v1461, 0.0
        %v1492 = vmax.f32 %v1463, 0.0
        %v1493 = vpack.c.bf16 %v1469, %v1467
        %v1494 = vpack.c.bf16 %v1470, %v1468
        %v1495 = vpack.c.bf16 %v1473, %v1471
        %v1496 = vpack.c.bf16 %v1474, %v1472
        %v1497 = vpack.c.bf16 %v1477, %v1475
        %v1498 = vpack.c.bf16 %v1478, %v1476
        %v1499 = vpack.c.bf16 %v1481, %v1479
        %v1500 = vpack.c.bf16 %v1482, %v1480
        %v1501 = vpack.c.bf16 %v1485, %v1483
        %v1502 = vpack.c.bf16 %v1486, %v1484
        %v1503 = vpack.c.bf16 %v1489, %v1487
        %v1504 = vpack.c.bf16 %v1490, %v1488
        %v1505 = vpack.c.bf16 %v1491, %v1491
        %v1506 = vpack.c.bf16 %v1492, %v1492
        %v1507 = vld [vmem:[#allocation7] sm:$0xf]
        %v1508 = vld [vmem:[#allocation7 + $0x4] sm:$0xf]
        %v1509 = vld [vmem:[#allocation7 + $0x8] sm:$0xf]
        %v1510 = vld [vmem:[#allocation7 + $0xc] sm:$0xf]
        %v1511 = vld [vmem:[#allocation7 + $0x10] sm:$0xf]
        %v1512 = vld [vmem:[#allocation7 + $0x14] sm:$0xf]
        %v1513 = vld [vmem:[#allocation7 + $0x18] sm:$0xf]
        %v1514 = vld [vmem:[#allocation7 + $0x1c] sm:$0xf]
        %v1515 = vld [vmem:[#allocation7 + $0x20] sm:$0xf]
        %v1516 = vld [vmem:[#allocation7 + $0x24] sm:$0xf]
        %v1517 = vld [vmem:[#allocation7 + $0x28] sm:$0xf]
        %v1518 = vld [vmem:[#allocation7 + $0x2c] sm:$0xf]
        %v1519 = vld [vmem:[#allocation7 + $0x30] sm:$0xf]
        %v1520 = vld [vmem:[#allocation7 + $0x34] sm:$0xf]
        %v1521 = vld [vmem:[#allocation7 + $0x38] sm:$0xf]
        %v1522 = vld [vmem:[#allocation7 + $0x3c] sm:$0xf]
        %v1523 = vld [vmem:[#allocation7 + $0x40] sm:$0xf]
        %v1524 = vld [vmem:[#allocation7 + $0x44] sm:$0xf]
        %v1525 = vld [vmem:[#allocation7 + $0x48] sm:$0xf]
        %v1526 = vld [vmem:[#allocation7 + $0x4c] sm:$0xf]
        %v1527 = vld [vmem:[#allocation7 + $0x50] sm:$0xf]
        %v1528 = vld [vmem:[#allocation7 + $0x54] sm:$0xf]
        %v1529 = vld [vmem:[#allocation7 + $0x58] sm:$0xf]
        %v1530 = vld [vmem:[#allocation7 + $0x5c] sm:$0xf]
        %v1531 = vld [vmem:[#allocation7 + $0x60] sm:$0xf]
        %v1532 = vld [vmem:[#allocation7 + $0x64] sm:$0xf]
        %v1533 = vld [vmem:[#allocation7 + $0x68] sm:$0xf]
        %v1534 = vld [vmem:[#allocation7 + $0x6c] sm:$0xf]
        %v1535 = vld [vmem:[#allocation7 + $0x70] sm:$0xf]
        %v1536 = vld [vmem:[#allocation7 + $0x74] sm:$0xf]
        %v1537 = vld [vmem:[#allocation7 + $0x78] sm:$0xf]
        %v1538 = vld [vmem:[#allocation7 + $0x7c] sm:$0xf]
        %v1539 = vld [vmem:[%s4] sm:$0x1]
        %v1541 = vlaneseq
        %v1542 = vshrl.u32 %v1541, 7
        %v1543 = vsub.s32 0, %v1542
        %v1544 = vrot.slane %v1539, %v1543
        %v1578 = vunpack.c.l.b16 %v1507
        %v1579 = vunpack.c.l.b16 %v1508
        %v1580 = vunpack.c.l.b16 %v1509
        %v1581 = vunpack.c.l.b16 %v1510
        %v1582 = vunpack.c.l.b16 %v1511
        %v1583 = vunpack.c.l.b16 %v1512
        %v1584 = vunpack.c.l.b16 %v1513
        %v1585 = vunpack.c.l.b16 %v1514
        %v1586 = vunpack.c.l.b16 %v1515
        %v1587 = vunpack.c.l.b16 %v1516
        %v1588 = vunpack.c.l.b16 %v1517
        %v1589 = vunpack.c.l.b16 %v1518
        %v1590 = vunpack.c.l.b16 %v1519
        %v1591 = vunpack.c.l.b16 %v1520
        %v1592 = vunpack.c.l.b16 %v1521
        %v1593 = vunpack.c.l.b16 %v1522
        %v1594 = vunpack.c.l.b16 %v1523
        %v1595 = vunpack.c.l.b16 %v1524
        %v1596 = vunpack.c.l.b16 %v1525
        %v1597 = vunpack.c.l.b16 %v1526
        %v1598 = vunpack.c.l.b16 %v1527
        %v1599 = vunpack.c.l.b16 %v1528
        %v1600 = vunpack.c.l.b16 %v1529
        %v1601 = vunpack.c.l.b16 %v1530
        %v1602 = vunpack.c.l.b16 %v1531
        %v1603 = vunpack.c.l.b16 %v1532
        %v1604 = vunpack.c.l.b16 %v1533
        %v1605 = vunpack.c.l.b16 %v1534
        %v1606 = vunpack.c.l.b16 %v1535
        %v1607 = vunpack.c.l.b16 %v1536
        %v1608 = vunpack.c.l.b16 %v1537
        %v1609 = vunpack.c.l.b16 %v1538
        %v1610 = vpack.c.b16 %v1579, %v1578
        %v1611 = vpack.c.b16 %v1581, %v1580
        %v1612 = vpack.c.b16 %v1583, %v1582
        %v1613 = vpack.c.b16 %v1585, %v1584
        %v1614 = vpack.c.b16 %v1587, %v1586
        %v1615 = vpack.c.b16 %v1589, %v1588
        %v1616 = vpack.c.b16 %v1591, %v1590
        %v1617 = vpack.c.b16 %v1593, %v1592
        %v1618 = vpack.c.b16 %v1595, %v1594
        %v1619 = vpack.c.b16 %v1597, %v1596
        %v1620 = vpack.c.b16 %v1599, %v1598
        %v1621 = vpack.c.b16 %v1601, %v1600
        %v1622 = vpack.c.b16 %v1603, %v1602
        %v1623 = vpack.c.b16 %v1605, %v1604
        %v1624 = vpack.c.b16 %v1607, %v1606
        %v1625 = vpack.c.b16 %v1609, %v1608
        %1642 = vmatprep.subr.bf16.mxu0 0
        %1643 = vmatpush1.bf16.msra.mxu0 %v1617
        %1644 = vmatprep.subr.bf16.mxu0 0
        %1645 = vmatpush1.bf16.msra.mxu0 %v1616
        %1646 = vmatprep.subr.bf16.mxu0 0
        %1647 = vmatpush1.bf16.msra.mxu0 %v1615
        %1648 = vmatprep.subr.bf16.mxu0 0
        %1649 = vmatpush1.bf16.msra.mxu0 %v1614
        %1650 = vmatprep.subr.bf16.mxu0 0
        %1651 = vmatpush1.bf16.msra.mxu0 %v1613
        %1652 = vmatprep.subr.bf16.mxu0 0
        %1653 = vmatpush1.bf16.msra.mxu0 %v1612
        %1654 = vmatprep.subr.bf16.mxu0 0
        %1655 = vmatpush1.bf16.msra.mxu0 %v1611
        %1656 = vmatprep.subr.bf16.mxu0 0
        %1657 = vmatpush1.bf16.msra.mxu0 %v1610
        %1658 = vmatprep.subr.bf16.mxu0 0
        %1659 = vmatpush2.bf16.msra.mxu0 %v1625
        %1660 = vmatprep.subr.bf16.mxu0 0
        %1661 = vmatpush2.bf16.msra.mxu0 %v1624
        %1662 = vmatprep.subr.bf16.mxu0 0
        %1663 = vmatpush2.bf16.msra.mxu0 %v1623
        %1664 = vmatprep.subr.bf16.mxu0 0
        %1665 = vmatpush2.bf16.msra.mxu0 %v1622
        %1666 = vmatprep.subr.bf16.mxu0 0
        %1667 = vmatpush2.bf16.msra.mxu0 %v1621
        %1668 = vmatprep.subr.bf16.mxu0 0
        %1669 = vmatpush2.bf16.msra.mxu0 %v1620
        %1670 = vmatprep.subr.bf16.mxu0 0
        %1671 = vmatpush2.bf16.msra.mxu0 %v1619
        %1672 = vmatprep.subr.bf16.mxu0 0
        %1673 = vmatpush2.bf16.msra.mxu0 %v1618
        %1674 = vmatprep.mubr.bf16.mxu0 %v1494
        %1675 = vmatmul.mubr.bf16.gmra.mxu0 %v1493
        %v1676 = vpop.f32.mrf.mxu0
        %v1677 = vadd.f32 %v1544, %v1676
        %v1678 = vpop.f32.mrf.mxu0
        %v1679 = vpop.f32.mrf.mxu0
        %v1680 = vadd.f32 %v1544, %v1679
        %v1681 = vpop.f32.mrf.mxu0
        %1682 = vmatprep.mubr.bf16.mxu0 %v1496
        %1683 = vmatmul.mubr.bf16.gmra.mxu0 %v1495
        %v1684 = vpop.f32.mrf.mxu0
        %v1685 = vadd.f32 %v1544, %v1684
        %v1686 = vpop.f32.mrf.mxu0
        %v1687 = vpop.f32.mrf.mxu0
        %v1688 = vadd.f32 %v1544, %v1687
        %v1689 = vpop.f32.mrf.mxu0
        %1690 = vmatprep.mubr.bf16.mxu0 %v1498
        %1691 = vmatmul.mubr.bf16.gmra.mxu0 %v1497
        %v1692 = vpop.f32.mrf.mxu0
        %v1693 = vadd.f32 %v1544, %v1692
        %v1694 = vpop.f32.mrf.mxu0
        %v1695 = vpop.f32.mrf.mxu0
        %v1696 = vadd.f32 %v1544, %v1695
        %v1697 = vpop.f32.mrf.mxu0
        %1698 = vmatprep.mubr.bf16.mxu0 %v1500
        %1699 = vmatmul.mubr.bf16.gmra.mxu0 %v1499
        %v1700 = vpop.f32.mrf.mxu0
        %v1701 = vadd.f32 %v1544, %v1700
        %v1702 = vpop.f32.mrf.mxu0
        %v1703 = vpop.f32.mrf.mxu0
        %v1704 = vadd.f32 %v1544, %v1703
        %v1705 = vpop.f32.mrf.mxu0
        %1706 = vmatprep.mubr.bf16.mxu0 %v1502
        %1707 = vmatmul.mubr.bf16.gmra.mxu0 %v1501
        %v1708 = vpop.f32.mrf.mxu0
        %v1709 = vadd.f32 %v1544, %v1708
        %v1710 = vpop.f32.mrf.mxu0
        %v1711 = vpop.f32.mrf.mxu0
        %v1712 = vadd.f32 %v1544, %v1711
        %v1713 = vpop.f32.mrf.mxu0
        %1714 = vmatprep.mubr.bf16.mxu0 %v1504
        %1715 = vmatmul.mubr.bf16.gmra.mxu0 %v1503
        %v1716 = vpop.f32.mrf.mxu0
        %v1717 = vadd.f32 %v1544, %v1716
        %v1718 = vpop.f32.mrf.mxu0
        %v1719 = vpop.f32.mrf.mxu0
        %v1720 = vadd.f32 %v1544, %v1719
        %v1721 = vpop.f32.mrf.mxu0
        %1722 = vmatprep.mubr.bf16.mxu0 %v1506
        %1723 = vmatmul.mubr.bf16.gmra.mxu0 %v1505
        %v1724 = vpop.f32.mrf.mxu0
        %v1725 = vadd.f32 %v1544, %v1724
        %v1726 = vpop.f32.mrf.mxu0
        %v1727 = vpop.f32.mrf.mxu0
        %v1728 = vpop.f32.mrf.mxu0
        %1729 = vdwg.mxu0
        %1730 = vst [vmem:[%s288] sm:$0xff] %v1677
        %1731 = vst [vmem:[%s288 + $0x8] sm:$0xff] %v1680
        %1732 = vst [vmem:[%s288 + $0x10] sm:$0xff] %v1685
        %1733 = vst [vmem:[%s288 + $0x18] sm:$0xff] %v1688
        %1734 = vst [vmem:[%s288 + $0x20] sm:$0xff] %v1693
        %1735 = vst [vmem:[%s288 + $0x28] sm:$0xff] %v1696
        %1736 = vst [vmem:[%s288 + $0x30] sm:$0xff] %v1701
        %1737 = vst [vmem:[%s288 + $0x38] sm:$0xff] %v1704
        %1738 = vst [vmem:[%s288 + $0x40] sm:$0xff] %v1709
        %1739 = vst [vmem:[%s288 + $0x48] sm:$0xff] %v1712
        %1740 = vst [vmem:[%s288 + $0x50] sm:$0xff] %v1717
        %1741 = vst [vmem:[%s288 + $0x58] sm:$0xff] %v1720
        %1742 = vst [vmem:[%s288 + $0x60] sm:$0xff] %v1725
        %s1743 = sand.u32 %s139, 1
        %s1744 = sand.u32 %s139, 1
        %s1745 = smul.addr %s1744, 104
        %s1746 = scalar_lea.vmem [#allocation9], %s1745
        // Predicated region
        $region57: #{vae_encoder_forward.1} parent=39 // pred_check
          %p1747 = pneg %p149
        $region58: #{vae_encoder_forward.1} parent=39 // pred_check_branch
          %1749 = sbr.rel (%p1747) target = $region60
        $region59: #{vae_encoder_forward.1} parent=39 // pred_region
          %s1750 = smul.u32 13, %s21
          %s1751 = ssub.s32 25, %s1750
          %p1752 = scmp.lt.s32.totalorder %s1751, 13
          %s1753 = scalar_select %p1752, %s1751, 13
          %s1754 = smul.u32 128, %s1753
          %p1755 = scmp.ne.s32.totalorder 0, %s1754
          %s1756 = smul.addr %s1750, 8
          %s1757 = scalar_lea.vmem %s5, %s1756
          // Predicated region
          $region61: #{vae_encoder_forward.1} parent=59 // pred_check
            %p1758 = pneg %p1755
          $region62: #{vae_encoder_forward.1} parent=59 // pred_check_branch
            %1760 = sbr.rel (%p1758) target = $region64
          $region63: #{vae_encoder_forward.1} parent=59 // pred_region
            // Predicated region
            $region65: #{vae_encoder_forward.1} parent=63 // pred_check
              _
            $region66: #{vae_encoder_forward.1} parent=63 // pred_check_branch
              %1762 = sbr.rel (0) target = $region68
            $region67: #{vae_encoder_forward.1} parent=63 // pred_region
              // Predicated region
              $region87: #{vae_encoder_forward.1} parent=67 // pred_check
                _
              $region88: #{vae_encoder_forward.1} parent=67 // pred_check_branch
                %1837 = sbr.rel (0) target = $region90
              $region89: #{vae_encoder_forward.1} parent=67 // pred_region
                %s1838 = sdiv.u32.pop %s1753, 13
                %s1839 = srem.u32.pop %s1753, 13
                // While loop
                $region91: #{vae_encoder_forward.1} parent=89 // loop_pre_header
                  _
                $region92: #{vae_encoder_forward.1} parent=89 // loop_header
                  %s1841 = sphi 0, %s1843
                  %p1842 = scmp.ge.s32.totalorder %s1841, %s1838
                  %s1846 = sphi 0, %s1877
                  %s1847 = sphi %s1746, %s1880
                  %s1848 = sphi %s1757, %s1881
                $region93: #{vae_encoder_forward.1} parent=89 // loop_header_branch
                  %1845 = sbr.rel (%p1842) target = $region97
                $region94: #{vae_encoder_forward.1} parent=89 // loop_body
                  %v1849 = vld [vmem:[%s1847] sm:$0xff]
                  %1850 = vst [vmem:[%s1848] sm:$0xff] %v1849
                  %v1851 = vld [vmem:[%s1847 + $0x8] sm:$0xff]
                  %1852 = vst [vmem:[%s1848 + $0x8] sm:$0xff] %v1851
                  %v1853 = vld [vmem:[%s1847 + $0x10] sm:$0xff]
                  %1854 = vst [vmem:[%s1848 + $0x10] sm:$0xff] %v1853
                  %v1855 = vld [vmem:[%s1847 + $0x18] sm:$0xff]
                  %1856 = vst [vmem:[%s1848 + $0x18] sm:$0xff] %v1855
                  %v1857 = vld [vmem:[%s1847 + $0x20] sm:$0xff]
                  %1858 = vst [vmem:[%s1848 + $0x20] sm:$0xff] %v1857
                  %v1859 = vld [vmem:[%s1847 + $0x28] sm:$0xff]
                  %1860 = vst [vmem:[%s1848 + $0x28] sm:$0xff] %v1859
                  %v1861 = vld [vmem:[%s1847 + $0x30] sm:$0xff]
                  %1862 = vst [vmem:[%s1848 + $0x30] sm:$0xff] %v1861
                  %v1863 = vld [vmem:[%s1847 + $0x38] sm:$0xff]
                  %1864 = vst [vmem:[%s1848 + $0x38] sm:$0xff] %v1863
                  %v1865 = vld [vmem:[%s1847 + $0x40] sm:$0xff]
                  %1866 = vst [vmem:[%s1848 + $0x40] sm:$0xff] %v1865
                  %v1867 = vld [vmem:[%s1847 + $0x48] sm:$0xff]
                  %1868 = vst [vmem:[%s1848 + $0x48] sm:$0xff] %v1867
                  %v1869 = vld [vmem:[%s1847 + $0x50] sm:$0xff]
                  %1870 = vst [vmem:[%s1848 + $0x50] sm:$0xff] %v1869
                  %v1871 = vld [vmem:[%s1847 + $0x58] sm:$0xff]
                  %1872 = vst [vmem:[%s1848 + $0x58] sm:$0xff] %v1871
                  %v1873 = vld [vmem:[%s1847 + $0x60] sm:$0xff]
                  %1874 = vst [vmem:[%s1848 + $0x60] sm:$0xff] %v1873
                  %s1875 = sadd.s32 1, %s1846
                  %p1876 = scmp.ge.s32.totalorder %s1875, %s1838
                  %s1877 = scalar_select %p1876, 0, %s1875
                  %s1878 = smul.u32 %s1877, 104
                  %s1879 = smul.u32 %s1877, 104
                  %s1880 = scalar_lea.vmem %s1746, %s1878 [#allocation9]
                  %s1881 = scalar_lea.vmem %s1757, %s1879
                $region95: #{vae_encoder_forward.1} parent=89 // loop_footer
                  %s1843 = sadd.s32 %s1841, 1
                $region96: #{vae_encoder_forward.1} parent=89 // loop_footer_branch
                  %1840 = sbr.rel target = $region92
                $region97: #{vae_encoder_forward.1} parent=89 // loop_exit
                  _
                %s1882 = sdiv.u32.pop %s1753, 13
                %s1883 = srem.u32.pop %s1753, 13
                %s1884 = smul.u32 %s1882, 13
                %s1885 = smul.u32 8, %s1884
                %s1886 = scalar_lea.vmem %s1746, %s1885 [#allocation9]
                %s1887 = smul.u32 8, %s1884
                %s1888 = scalar_lea.vmem %s1757, %s1887
                // While loop
                $region98: #{vae_encoder_forward.1} parent=89 // loop_pre_header
                  _
                $region99: #{vae_encoder_forward.1} parent=89 // loop_header
                  %s1890 = sphi 0, %s1892
                  %p1891 = scmp.ge.s32.totalorder %s1890, %s1883
                  %s1895 = sphi 0, %s1902
                  %s1896 = sphi %s1886, %s1905
                  %s1897 = sphi %s1888, %s1906
                $region100: #{vae_encoder_forward.1} parent=89 // loop_header_branch
                  %1894 = sbr.rel (%p1891) target = $region104
                $region101: #{vae_encoder_forward.1} parent=89 // loop_body
                  %v1898 = vld [vmem:[%s1896] sm:$0xff]
                  %1899 = vst [vmem:[%s1897] sm:$0xff] %v1898
                  %s1900 = sadd.s32 1, %s1895
                  %p1901 = scmp.ge.s32.totalorder %s1900, %s1883
                  %s1902 = scalar_select %p1901, 0, %s1900
                  %s1903 = smul.u32 %s1902, 8
                  %s1904 = smul.u32 %s1902, 8
                  %s1905 = scalar_lea.vmem %s1886, %s1903 [#allocation9]
                  %s1906 = scalar_lea.vmem %s1888, %s1904
                $region102: #{vae_encoder_forward.1} parent=89 // loop_footer
                  %s1892 = sadd.s32 %s1890, 1
                $region103: #{vae_encoder_forward.1} parent=89 // loop_footer_branch
                  %1889 = sbr.rel target = $region99
                $region104: #{vae_encoder_forward.1} parent=89 // loop_exit
                  _
              $region90: #{vae_encoder_forward.1} parent=67 // pred_fallthru
                _
              // Predicated region
              $region105: #{vae_encoder_forward.1} parent=67 // pred_check
                _
              $region106: #{vae_encoder_forward.1} parent=67 // pred_check_branch
                %1908 = sbr.rel target = $region108
              $region107: #{vae_encoder_forward.1} parent=67 // pred_region
                _
              $region108: #{vae_encoder_forward.1} parent=67 // pred_fallthru
                _
            $region68: #{vae_encoder_forward.1} parent=63 // pred_fallthru
              _
            // Predicated region
            $region69: #{vae_encoder_forward.1} parent=63 // pred_check
              _
            $region70: #{vae_encoder_forward.1} parent=63 // pred_check_branch
              %1764 = sbr.rel target = $region72
            $region71: #{vae_encoder_forward.1} parent=63 // pred_region
              %s1766 = ssub.s32 256, 1
              %s1767 = sdiv.u32.pop %s1753, 13
              %s1768 = srem.u32.pop %s1753, 13
              // While loop
              $region73: #{vae_encoder_forward.1} parent=71 // loop_pre_header
                _
              $region74: #{vae_encoder_forward.1} parent=71 // loop_header
                %s1770 = sphi 0, %s1772
                %p1771 = scmp.ge.s32.totalorder %s1770, %s1767
                %s1775 = sphi 0, %s1806
                %s1776 = sphi %s1746, %s1809
                %s1777 = sphi %s1757, %s1810
              $region75: #{vae_encoder_forward.1} parent=71 // loop_header_branch
                %1774 = sbr.rel (%p1771) target = $region79
              $region76: #{vae_encoder_forward.1} parent=71 // loop_body
                %v1778 = vld [vmem:[%s1776] sm:%s1766]
                %1779 = vst [vmem:[%s1777] sm:%s1766] %v1778
                %v1780 = vld [vmem:[%s1776 + $0x8] sm:%s1766]
                %1781 = vst [vmem:[%s1777 + $0x8] sm:%s1766] %v1780
                %v1782 = vld [vmem:[%s1776 + $0x10] sm:%s1766]
                %1783 = vst [vmem:[%s1777 + $0x10] sm:%s1766] %v1782
                %v1784 = vld [vmem:[%s1776 + $0x18] sm:%s1766]
                %1785 = vst [vmem:[%s1777 + $0x18] sm:%s1766] %v1784
                %v1786 = vld [vmem:[%s1776 + $0x20] sm:%s1766]
                %1787 = vst [vmem:[%s1777 + $0x20] sm:%s1766] %v1786
                %v1788 = vld [vmem:[%s1776 + $0x28] sm:%s1766]
                %1789 = vst [vmem:[%s1777 + $0x28] sm:%s1766] %v1788
                %v1790 = vld [vmem:[%s1776 + $0x30] sm:%s1766]
                %1791 = vst [vmem:[%s1777 + $0x30] sm:%s1766] %v1790
                %v1792 = vld [vmem:[%s1776 + $0x38] sm:%s1766]
                %1793 = vst [vmem:[%s1777 + $0x38] sm:%s1766] %v1792
                %v1794 = vld [vmem:[%s1776 + $0x40] sm:%s1766]
                %1795 = vst [vmem:[%s1777 + $0x40] sm:%s1766] %v1794
                %v1796 = vld [vmem:[%s1776 + $0x48] sm:%s1766]
                %1797 = vst [vmem:[%s1777 + $0x48] sm:%s1766] %v1796
                %v1798 = vld [vmem:[%s1776 + $0x50] sm:%s1766]
                %1799 = vst [vmem:[%s1777 + $0x50] sm:%s1766] %v1798
                %v1800 = vld [vmem:[%s1776 + $0x58] sm:%s1766]
                %1801 = vst [vmem:[%s1777 + $0x58] sm:%s1766] %v1800
                %v1802 = vld [vmem:[%s1776 + $0x60] sm:%s1766]
                %1803 = vst [vmem:[%s1777 + $0x60] sm:%s1766] %v1802
                %s1804 = sadd.s32 1, %s1775
                %p1805 = scmp.ge.s32.totalorder %s1804, %s1767
                %s1806 = scalar_select %p1805, 0, %s1804
                %s1807 = smul.u32 %s1806, 104
                %s1808 = smul.u32 %s1806, 104
                %s1809 = scalar_lea.vmem %s1746, %s1807 [#allocation9]
                %s1810 = scalar_lea.vmem %s1757, %s1808
              $region77: #{vae_encoder_forward.1} parent=71 // loop_footer
                %s1772 = sadd.s32 %s1770, 1
              $region78: #{vae_encoder_forward.1} parent=71 // loop_footer_branch
                %1769 = sbr.rel target = $region74
              $region79: #{vae_encoder_forward.1} parent=71 // loop_exit
                _
              %s1811 = sdiv.u32.pop %s1753, 13
              %s1812 = srem.u32.pop %s1753, 13
              %s1813 = smul.u32 %s1811, 13
              %s1814 = smul.u32 8, %s1813
              %s1815 = scalar_lea.vmem %s1746, %s1814 [#allocation9]
              %s1816 = smul.u32 8, %s1813
              %s1817 = scalar_lea.vmem %s1757, %s1816
              // While loop
              $region80: #{vae_encoder_forward.1} parent=71 // loop_pre_header
                _
              $region81: #{vae_encoder_forward.1} parent=71 // loop_header
                %s1819 = sphi 0, %s1821
                %p1820 = scmp.ge.s32.totalorder %s1819, %s1812
                %s1824 = sphi 0, %s1831
                %s1825 = sphi %s1815, %s1834
                %s1826 = sphi %s1817, %s1835
              $region82: #{vae_encoder_forward.1} parent=71 // loop_header_branch
                %1823 = sbr.rel (%p1820) target = $region86
              $region83: #{vae_encoder_forward.1} parent=71 // loop_body
                %v1827 = vld [vmem:[%s1825] sm:%s1766]
                %1828 = vst [vmem:[%s1826] sm:%s1766] %v1827
                %s1829 = sadd.s32 1, %s1824
                %p1830 = scmp.ge.s32.totalorder %s1829, %s1812
                %s1831 = scalar_select %p1830, 0, %s1829
                %s1832 = smul.u32 %s1831, 8
                %s1833 = smul.u32 %s1831, 8
                %s1834 = scalar_lea.vmem %s1815, %s1832 [#allocation9]
                %s1835 = scalar_lea.vmem %s1817, %s1833
              $region84: #{vae_encoder_forward.1} parent=71 // loop_footer
                %s1821 = sadd.s32 %s1819, 1
              $region85: #{vae_encoder_forward.1} parent=71 // loop_footer_branch
                %1818 = sbr.rel target = $region81
              $region86: #{vae_encoder_forward.1} parent=71 // loop_exit
                _
            $region72: #{vae_encoder_forward.1} parent=63 // pred_fallthru
              _
          $region64: #{vae_encoder_forward.1} parent=59 // pred_fallthru
            _
          %1909 = vnop
        $region60: #{vae_encoder_forward.1} parent=39 // pred_fallthru
          _
      $region40: #{vae_encoder_forward.1} parent=5 // pred_fallthru
        _
      %p1910 = scmp.le.s32.totalorder 2, %s16
      // Predicated region
      $region109: #{vae_encoder_forward.1} parent=5 // pred_check
        %p1911 = pneg %p1910
      $region110: #{vae_encoder_forward.1} parent=5 // pred_check_branch
        %1913 = sbr.rel (%p1911) target = $region112
      $region111: #{vae_encoder_forward.1} parent=5 // pred_region
        %s1914 = ssub.s32 %s16, 2
        // Predicated region
        $region113: #{vae_encoder_forward.1} parent=111 // pred_check
          %p1915 = pneg %p155
        $region114: #{vae_encoder_forward.1} parent=111 // pred_check_branch
          %1917 = sbr.rel (%p1915) target = $region116
        $region115: #{vae_encoder_forward.1} parent=111 // pred_region
          %s1918 = sand.u32 %s140, 1
          %s1919 = sand.u32 %s140, 1
          %s1920 = smul.addr %s1919, 104
          %s1921 = scalar_lea.vmem [#allocation9], %s1920
        $region116: #{vae_encoder_forward.1} parent=111 // pred_fallthru
          _
      $region112: #{vae_encoder_forward.1} parent=5 // pred_fallthru
        _
    $region6: #{vae_encoder_forward.1} parent=1 // loop_footer
      %s20 = sadd.s32 1, %s16
    $region7: #{vae_encoder_forward.1} parent=1 // loop_footer_branch
      %15 = sbr.rel target = $region3
    $region8: #{vae_encoder_forward.1} parent=1 // loop_exit
      _
    %1922 = vsyncpa [#allocation3], 1
    %s1923 = scalar_lea.sflag [#allocation3], 1
    %1924 = vsyncpa %s1923, 1
    %1925 = vsyncpa [#allocation5], 1
    %1926 = vsyncpa [#allocation8], 1

</llo_original>
